<compile_context>
chip_gen: v5e
topology: v5e:2x2
jax: 0.10.0
libtpu: 0.0.40
codegen_flags: <defaults>
</compile_context>

<pallas_src>
import jax
import jax.numpy as jnp
import numpy as np
from jax.experimental import pallas as pl
from jax.experimental.pallas import tpu as pltpu  # noqa: F401  (TPU backend)

BIG = 1e30          # mask magnitude (== NEG_FILL of the reference)
LANE = 128
SUBLANE = 8


def _round_up(x, m):
    return (x + m - 1) // m * m


def _sage_pool_layer(feat_src, feat_dst, ew, em, n_src_eff,
                     wpool, bpool, wself, bself, wneigh, bneigh):
    """One pool-SAGEConv layer on padded, VMEM-resident values."""
    # h_pool = relu(fc_pool(feat_src))
    h_pool = jnp.dot(feat_src, wpool, preferred_element_type=jnp.float32) + bpool
    h_pool = jnp.maximum(h_pool, 0.0)                        # [n_src_pad, F]

    # neigh[d] = max_{s in N(d)} h_pool[s] * w[d, s]
    # 2-D running max: no 3-D intermediate, no select.  Off-edge entries
    # contribute exactly 0*h - BIG = -BIG because dense ew is 0 off-edge.
    n_dst_pad = ew.shape[0]
    fdim = h_pool.shape[1]
    neg = (em - 1.0) * BIG                                   # 0 on edges, -BIG off
    h_neigh = jnp.full((n_dst_pad, fdim), -BIG, jnp.float32)
    for s in range(n_src_eff):                               # static, fully unrolled
        cand = ew[:, s:s + 1] * h_pool[s:s + 1, :] + neg[:, s:s + 1]
        h_neigh = jnp.maximum(h_neigh, cand)
    deg = jnp.sum(em, axis=1, keepdims=True)
    h_neigh = jnp.where(deg > 0.0, h_neigh, 0.0)             # DGL max: 0-in-degree -> 0

    # rst = fc_self(h_dst) + fc_neigh(h_neigh)
    # TODO(synk): for realistic graph sizes, tile with a (dst "parallel",
    # src "arbitrary") grid + VMEM running-max accumulators and feed the
    # matmuls bf16 (keep the max path f32) instead of whole-graph residency.
    return (jnp.dot(feat_dst, wself, preferred_element_type=jnp.float32) + bself
            + jnp.dot(h_neigh, wneigh, preferred_element_type=jnp.float32) + bneigh)


def _make_fused_kernel(n_layers, n_dst_pad, n_src_eff):
    """Fused forward over all layers.  Ref order:
       x, (ew_l, em_l)*L, (wpool,bpool,wself,bself,wneigh,bneigh)*L, out."""

    def kernel(*refs):
        x_ref = refs[0]
        edge_refs = refs[1:1 + 2 * n_layers]
        prm_refs = refs[1 + 2 * n_layers:1 + 8 * n_layers]
        out_ref = refs[-1]

        h = x_ref[...]
        for l in range(n_layers):
            ew = edge_refs[2 * l][...]
            em = edge_refs[2 * l + 1][...]
            params = tuple(prm_refs[6 * l + i][...] for i in range(6))
            h = _sage_pool_layer(h, h[:n_dst_pad[l]], ew, em, n_src_eff[l], *params)
            if l != n_layers - 1:
                h = jnp.maximum(h, 0.0)      # inter-layer F.relu; dropout = identity
        out_ref[...] = h

    return kernel


def model_forward(blocks, x, layer_params):
    """blocks: list of (n_dst, edge_w[d,s], edge_m[d,s]); x: [n_src0, in_feats]."""
    n_layers = len(layer_params)
    assert len(blocks) == n_layers

    # ---- static padded geometry -------------------------------------------
    feat_dims = [x.shape[1]] + [p[2].shape[1] for p in layer_params]  # wself: [in, out]
    fpad = _round_up(max(feat_dims), LANE)
    n_dst_real = [b[0] for b in blocks]
    n_src_pad = [_round_up(x.shape[0], SUBLANE)]
    n_dst_pad, n_src_eff = [], []
    for l in range(n_layers):
        n_src_eff.append(blocks[l][1].shape[1])              # real src count of block l
        n_dst_pad.append(_round_up(n_dst_real[l], SUBLANE))
        if l + 1 < n_layers:
            n_src_pad.append(n_dst_pad[l])                   # next layer's src = this dst

    def pad2(a, rows, cols):
        a = a.astype(jnp.float32)
        return jnp.pad(a, ((0, rows - a.shape[0]), (0, cols - a.shape[1])))

    # ---- zero-pad inputs (exact; see header notes) -------------------------
    args = [pad2(x, n_src_pad[0], fpad)]
    for l in range(n_layers):
        _, ew, em = blocks[l]
        args.append(pad2(ew, n_dst_pad[l], n_src_pad[l]))
        args.append(pad2(em, n_dst_pad[l], n_src_pad[l]))
    for l in range(n_layers):
        wpool, bpool, wself, bself, wneigh, bneigh = layer_params[l]
        args += [pad2(wpool, fpad, fpad), pad2(bpool, 1, fpad),
                 pad2(wself, fpad, fpad), pad2(bself, 1, fpad),
                 pad2(wneigh, fpad, fpad), pad2(bneigh, 1, fpad)]

    out_pad = pl.pallas_call(
        _make_fused_kernel(n_layers, tuple(n_dst_pad), tuple(n_src_eff)),
        out_shape=jax.ShapeDtypeStruct((n_dst_pad[-1], fpad), jnp.float32),
    )(*args)
    return out_pad[:n_dst_real[-1], :feat_dims[-1]]


# ----------------------------- pure-JAX reference -----------------------------
def layer_ref(feat_src, feat_dst, edge_w, edge_m, params, apply_relu):
    wpool, bpool, wself, bself, wneigh, bneigh = params
    h_pool = jnp.maximum(feat_src @ wpool + bpool, 0.0)
    msgs = h_pool[None, :, :] * edge_w[:, :, None]
    msgs = jnp.where(edge_m[:, :, None] > 0.0, msgs, -BIG)
    h_neigh = jnp.max(msgs, axis=1)
    deg = jnp.sum(edge_m, axis=1, keepdims=True)
    h_neigh = jnp.where(deg > 0.0, h_neigh, 0.0)
    rst = feat_dst @ wself + bself + h_neigh @ wneigh + bneigh
    return jnp.maximum(rst, 0.0) if apply_relu else rst


def model_ref(blocks, x, layer_params):
    h = x
    n_layers = len(layer_params)
    for l, ((n_dst, ew, em), params) in enumerate(zip(blocks, layer_params)):
        h = layer_ref(h, h[:n_dst], ew, em, params, l != n_layers - 1)
    return h


# --------------------------------- main ---------------------------------------
if __name__ == "__main__":
    key = jax.random.PRNGKey(0)

    in_feats = 32
    n_hidden = [32, 16]
    n_layers = 2
    # block sizes: src nodes per block; dst of block l == src of block l+1
    n_src = [16, 12]
    n_dst = [12, 8]

    def xavier(key, shape, gain):
        fan_in, fan_out = shape
        a = gain * np.sqrt(6.0 / (fan_in + fan_out))
        return jax.random.uniform(key, shape, jnp.float32, -a, a)

    layer_params = []
    dims = [in_feats] + n_hidden
    gain = float(np.sqrt(2.0))  # calculate_gain('relu')
    for l in range(n_layers):
        fi, fo = dims[l], dims[l + 1]
        key, k1, k2, k3, k4, k5, k6 = jax.random.split(key, 7)
        wpool = xavier(k1, (fi, fi), gain)               # fc_pool (in -> in), stored [in, out]
        bpool = jax.random.uniform(k2, (1, fi), jnp.float32, -0.1, 0.1)
        wself = xavier(k3, (fi, fo), 1.0)                # fc_self
        bself = jax.random.uniform(k4, (1, fo), jnp.float32, -0.1, 0.1)
        wneigh = xavier(k5, (fi, fo), gain)              # fc_neigh
        bneigh = jax.random.uniform(k6, (1, fo), jnp.float32, -0.1, 0.1)
        layer_params.append((wpool, bpool, wself, bself, wneigh, bneigh))

    # Build dense blocks (adjacency mask + per-edge scalar weights).
    blocks = []
    for l in range(n_layers):
        key, km, kw = jax.random.split(key, 3)
        m = jax.random.bernoulli(km, 0.4, (n_dst[l], n_src[l])).astype(jnp.float32)
        # guarantee every dst node has at least one incoming edge (self edge)
        m = jnp.maximum(m, jnp.eye(n_dst[l], n_src[l], dtype=jnp.float32))
        w = jax.random.uniform(kw, (n_dst[l], n_src[l]), jnp.float32, 0.1, 1.0) * m
        blocks.append((n_dst[l], w, m))

    key, kx = jax.random.split(key)
    x = jax.random.normal(kx, (n_src[0], in_feats), jnp.float32)

    out = model_forward(blocks, x, layer_params)
    out = jax.block_until_ready(out)

    ref = model_ref(blocks, x, layer_params)
    np.testing.assert_allclose(np.asarray(out), np.asarray(ref), rtol=1e-5, atol=1e-5)
    assert out.shape == (n_dst[-1], n_hidden[-1])
    print("KERNEL_OK")
</pallas_src>

<mosaic_0001>
module attributes {stable_mosaic.version = 11 : i64} {
  func.func @kernel(%arg0: memref<16x128xf32, #tpu.memory_space<vmem>>, %arg1: memref<16x16xf32, #tpu.memory_space<vmem>>, %arg2: memref<16x16xf32, #tpu.memory_space<vmem>>, %arg3: memref<8x16xf32, #tpu.memory_space<vmem>>, %arg4: memref<8x16xf32, #tpu.memory_space<vmem>>, %arg5: memref<128x128xf32, #tpu.memory_space<vmem>>, %arg6: memref<1x128xf32, #tpu.memory_space<vmem>>, %arg7: memref<128x128xf32, #tpu.memory_space<vmem>>, %arg8: memref<1x128xf32, #tpu.memory_space<vmem>>, %arg9: memref<128x128xf32, #tpu.memory_space<vmem>>, %arg10: memref<1x128xf32, #tpu.memory_space<vmem>>, %arg11: memref<128x128xf32, #tpu.memory_space<vmem>>, %arg12: memref<1x128xf32, #tpu.memory_space<vmem>>, %arg13: memref<128x128xf32, #tpu.memory_space<vmem>>, %arg14: memref<1x128xf32, #tpu.memory_space<vmem>>, %arg15: memref<128x128xf32, #tpu.memory_space<vmem>>, %arg16: memref<1x128xf32, #tpu.memory_space<vmem>>, %arg17: memref<8x128xf32, #tpu.memory_space<vmem>>) attributes {dimension_semantics = [], scalar_prefetch = 0 : i64, scratch_operands = 0 : i64, tpu.core_type = #tpu.core_type<tc>} {
    %c0 = arith.constant 0 : index
    %c0_0 = arith.constant 0 : index
    %0 = vector.load %arg0[%c0, %c0_0] : memref<16x128xf32, #tpu.memory_space<vmem>>, vector<16x128xf32>
    %c0_1 = arith.constant 0 : index
    %c0_2 = arith.constant 0 : index
    %1 = vector.load %arg1[%c0_1, %c0_2] : memref<16x16xf32, #tpu.memory_space<vmem>>, vector<16x16xf32>
    %c0_3 = arith.constant 0 : index
    %c0_4 = arith.constant 0 : index
    %2 = vector.load %arg2[%c0_3, %c0_4] : memref<16x16xf32, #tpu.memory_space<vmem>>, vector<16x16xf32>
    %c0_5 = arith.constant 0 : index
    %c0_6 = arith.constant 0 : index
    %3 = vector.load %arg5[%c0_5, %c0_6] : memref<128x128xf32, #tpu.memory_space<vmem>>, vector<128x128xf32>
    %c0_7 = arith.constant 0 : index
    %c0_8 = arith.constant 0 : index
    %4 = vector.load %arg6[%c0_7, %c0_8] : memref<1x128xf32, #tpu.memory_space<vmem>>, vector<1x128xf32>
    %c0_9 = arith.constant 0 : index
    %c0_10 = arith.constant 0 : index
    %5 = vector.load %arg7[%c0_9, %c0_10] : memref<128x128xf32, #tpu.memory_space<vmem>>, vector<128x128xf32>
    %c0_11 = arith.constant 0 : index
    %c0_12 = arith.constant 0 : index
    %6 = vector.load %arg8[%c0_11, %c0_12] : memref<1x128xf32, #tpu.memory_space<vmem>>, vector<1x128xf32>
    %c0_13 = arith.constant 0 : index
    %c0_14 = arith.constant 0 : index
    %7 = vector.load %arg9[%c0_13, %c0_14] : memref<128x128xf32, #tpu.memory_space<vmem>>, vector<128x128xf32>
    %c0_15 = arith.constant 0 : index
    %c0_16 = arith.constant 0 : index
    %8 = vector.load %arg10[%c0_15, %c0_16] : memref<1x128xf32, #tpu.memory_space<vmem>>, vector<1x128xf32>
    %cst = arith.constant dense<0.000000e+00> : vector<16x128xf32>
    %9 = tpu.matmul %0, %3, %cst {dimension_numbers = #tpu.dot_dimension_numbers<[1], [0], [0], [1], [0, 0, 1, 1], [], []>} : vector<16x128xf32>, vector<128x128xf32>, vector<16x128xf32> -> vector<16x128xf32>
    %10 = vector.broadcast %4 : vector<1x128xf32> to vector<16x128xf32>
    %11 = arith.addf %9, %10 : vector<16x128xf32>
    %cst_17 = arith.constant 0.000000e+00 : f32
    %12 = vector.broadcast %cst_17 : f32 to vector<16x128xf32>
    %13 = arith.maximumf %11, %12 : vector<16x128xf32>
    %cst_18 = arith.constant 1.000000e+00 : f32
    %14 = vector.broadcast %cst_18 : f32 to vector<16x16xf32>
    %15 = arith.subf %2, %14 : vector<16x16xf32>
    %cst_19 = arith.constant 1.000000e+30 : f32
    %16 = vector.broadcast %cst_19 : f32 to vector<16x16xf32>
    %17 = arith.mulf %15, %16 : vector<16x16xf32>
    %cst_20 = arith.constant -1.000000e+30 : f32
    %18 = vector.broadcast %cst_20 : f32 to vector<16x128xf32>
    %19 = vector.extract_strided_slice %1 {offsets = [0, 0], sizes = [16, 1], strides = [1, 1]} : vector<16x16xf32> to vector<16x1xf32>
    %20 = vector.extract_strided_slice %13 {offsets = [0, 0], sizes = [1, 128], strides = [1, 1]} : vector<16x128xf32> to vector<1x128xf32>
    %21 = vector.broadcast %19 : vector<16x1xf32> to vector<16x128xf32>
    %22 = vector.broadcast %20 : vector<1x128xf32> to vector<16x128xf32>
    %23 = arith.mulf %21, %22 : vector<16x128xf32>
    %24 = vector.extract_strided_slice %17 {offsets = [0, 0], sizes = [16, 1], strides = [1, 1]} : vector<16x16xf32> to vector<16x1xf32>
    %25 = vector.broadcast %24 : vector<16x1xf32> to vector<16x128xf32>
    %26 = arith.addf %23, %25 : vector<16x128xf32>
    %27 = arith.maximumf %18, %26 : vector<16x128xf32>
    %28 = vector.extract_strided_slice %1 {offsets = [0, 1], sizes = [16, 1], strides = [1, 1]} : vector<16x16xf32> to vector<16x1xf32>
    %29 = vector.extract_strided_slice %13 {offsets = [1, 0], sizes = [1, 128], strides = [1, 1]} : vector<16x128xf32> to vector<1x128xf32>
    %30 = vector.broadcast %28 : vector<16x1xf32> to vector<16x128xf32>
    %31 = vector.broadcast %29 : vector<1x128xf32> to vector<16x128xf32>
    %32 = arith.mulf %30, %31 : vector<16x128xf32>
    %33 = vector.extract_strided_slice %17 {offsets = [0, 1], sizes = [16, 1], strides = [1, 1]} : vector<16x16xf32> to vector<16x1xf32>
    %34 = vector.broadcast %33 : vector<16x1xf32> to vector<16x128xf32>
    %35 = arith.addf %32, %34 : vector<16x128xf32>
    %36 = arith.maximumf %27, %35 : vector<16x128xf32>
    %37 = vector.extract_strided_slice %1 {offsets = [0, 2], sizes = [16, 1], strides = [1, 1]} : vector<16x16xf32> to vector<16x1xf32>
    %38 = vector.extract_strided_slice %13 {offsets = [2, 0], sizes = [1, 128], strides = [1, 1]} : vector<16x128xf32> to vector<1x128xf32>
    %39 = vector.broadcast %37 : vector<16x1xf32> to vector<16x128xf32>
    %40 = vector.broadcast %38 : vector<1x128xf32> to vector<16x128xf32>
    %41 = arith.mulf %39, %40 : vector<16x128xf32>
    %42 = vector.extract_strided_slice %17 {offsets = [0, 2], sizes = [16, 1], strides = [1, 1]} : vector<16x16xf32> to vector<16x1xf32>
    %43 = vector.broadcast %42 : vector<16x1xf32> to vector<16x128xf32>
    %44 = arith.addf %41, %43 : vector<16x128xf32>
    %45 = arith.maximumf %36, %44 : vector<16x128xf32>
    %46 = vector.extract_strided_slice %1 {offsets = [0, 3], sizes = [16, 1], strides = [1, 1]} : vector<16x16xf32> to vector<16x1xf32>
    %47 = vector.extract_strided_slice %13 {offsets = [3, 0], sizes = [1, 128], strides = [1, 1]} : vector<16x128xf32> to vector<1x128xf32>
    %48 = vector.broadcast %46 : vector<16x1xf32> to vector<16x128xf32>
    %49 = vector.broadcast %47 : vector<1x128xf32> to vector<16x128xf32>
    %50 = arith.mulf %48, %49 : vector<16x128xf32>
    %51 = vector.extract_strided_slice %17 {offsets = [0, 3], sizes = [16, 1], strides = [1, 1]} : vector<16x16xf32> to vector<16x1xf32>
    %52 = vector.broadcast %51 : vector<16x1xf32> to vector<16x128xf32>
    %53 = arith.addf %50, %52 : vector<16x128xf32>
    %54 = arith.maximumf %45, %53 : vector<16x128xf32>
    %55 = vector.extract_strided_slice %1 {offsets = [0, 4], sizes = [16, 1], strides = [1, 1]} : vector<16x16xf32> to vector<16x1xf32>
    %56 = vector.extract_strided_slice %13 {offsets = [4, 0], sizes = [1, 128], strides = [1, 1]} : vector<16x128xf32> to vector<1x128xf32>
    %57 = vector.broadcast %55 : vector<16x1xf32> to vector<16x128xf32>
    %58 = vector.broadcast %56 : vector<1x128xf32> to vector<16x128xf32>
    %59 = arith.mulf %57, %58 : vector<16x128xf32>
    %60 = vector.extract_strided_slice %17 {offsets = [0, 4], sizes = [16, 1], strides = [1, 1]} : vector<16x16xf32> to vector<16x1xf32>
    %61 = vector.broadcast %60 : vector<16x1xf32> to vector<16x128xf32>
    %62 = arith.addf %59, %61 : vector<16x128xf32>
    %63 = arith.maximumf %54, %62 : vector<16x128xf32>
    %64 = vector.extract_strided_slice %1 {offsets = [0, 5], sizes = [16, 1], strides = [1, 1]} : vector<16x16xf32> to vector<16x1xf32>
    %65 = vector.extract_strided_slice %13 {offsets = [5, 0], sizes = [1, 128], strides = [1, 1]} : vector<16x128xf32> to vector<1x128xf32>
    %66 = vector.broadcast %64 : vector<16x1xf32> to vector<16x128xf32>
    %67 = vector.broadcast %65 : vector<1x128xf32> to vector<16x128xf32>
    %68 = arith.mulf %66, %67 : vector<16x128xf32>
    %69 = vector.extract_strided_slice %17 {offsets = [0, 5], sizes = [16, 1], strides = [1, 1]} : vector<16x16xf32> to vector<16x1xf32>
    %70 = vector.broadcast %69 : vector<16x1xf32> to vector<16x128xf32>
    %71 = arith.addf %68, %70 : vector<16x128xf32>
    %72 = arith.maximumf %63, %71 : vector<16x128xf32>
    %73 = vector.extract_strided_slice %1 {offsets = [0, 6], sizes = [16, 1], strides = [1, 1]} : vector<16x16xf32> to vector<16x1xf32>
    %74 = vector.extract_strided_slice %13 {offsets = [6, 0], sizes = [1, 128], strides = [1, 1]} : vector<16x128xf32> to vector<1x128xf32>
    %75 = vector.broadcast %73 : vector<16x1xf32> to vector<16x128xf32>
    %76 = vector.broadcast %74 : vector<1x128xf32> to vector<16x128xf32>
    %77 = arith.mulf %75, %76 : vector<16x128xf32>
    %78 = vector.extract_strided_slice %17 {offsets = [0, 6], sizes = [16, 1], strides = [1, 1]} : vector<16x16xf32> to vector<16x1xf32>
    %79 = vector.broadcast %78 : vector<16x1xf32> to vector<16x128xf32>
    %80 = arith.addf %77, %79 : vector<16x128xf32>
    %81 = arith.maximumf %72, %80 : vector<16x128xf32>
    %82 = vector.extract_strided_slice %1 {offsets = [0, 7], sizes = [16, 1], strides = [1, 1]} : vector<16x16xf32> to vector<16x1xf32>
    %83 = vector.extract_strided_slice %13 {offsets = [7, 0], sizes = [1, 128], strides = [1, 1]} : vector<16x128xf32> to vector<1x128xf32>
    %84 = vector.broadcast %82 : vector<16x1xf32> to vector<16x128xf32>
    %85 = vector.broadcast %83 : vector<1x128xf32> to vector<16x128xf32>
    %86 = arith.mulf %84, %85 : vector<16x128xf32>
    %87 = vector.extract_strided_slice %17 {offsets = [0, 7], sizes = [16, 1], strides = [1, 1]} : vector<16x16xf32> to vector<16x1xf32>
    %88 = vector.broadcast %87 : vector<16x1xf32> to vector<16x128xf32>
    %89 = arith.addf %86, %88 : vector<16x128xf32>
    %90 = arith.maximumf %81, %89 : vector<16x128xf32>
    %91 = vector.extract_strided_slice %1 {offsets = [0, 8], sizes = [16, 1], strides = [1, 1]} : vector<16x16xf32> to vector<16x1xf32>
    %92 = vector.extract_strided_slice %13 {offsets = [8, 0], sizes = [1, 128], strides = [1, 1]} : vector<16x128xf32> to vector<1x128xf32>
    %93 = vector.broadcast %91 : vector<16x1xf32> to vector<16x128xf32>
    %94 = vector.broadcast %92 : vector<1x128xf32> to vector<16x128xf32>
    %95 = arith.mulf %93, %94 : vector<16x128xf32>
    %96 = vector.extract_strided_slice %17 {offsets = [0, 8], sizes = [16, 1], strides = [1, 1]} : vector<16x16xf32> to vector<16x1xf32>
    %97 = vector.broadcast %96 : vector<16x1xf32> to vector<16x128xf32>
    %98 = arith.addf %95, %97 : vector<16x128xf32>
    %99 = arith.maximumf %90, %98 : vector<16x128xf32>
    %100 = vector.extract_strided_slice %1 {offsets = [0, 9], sizes = [16, 1], strides = [1, 1]} : vector<16x16xf32> to vector<16x1xf32>
    %101 = vector.extract_strided_slice %13 {offsets = [9, 0], sizes = [1, 128], strides = [1, 1]} : vector<16x128xf32> to vector<1x128xf32>
    %102 = vector.broadcast %100 : vector<16x1xf32> to vector<16x128xf32>
    %103 = vector.broadcast %101 : vector<1x128xf32> to vector<16x128xf32>
    %104 = arith.mulf %102, %103 : vector<16x128xf32>
    %105 = vector.extract_strided_slice %17 {offsets = [0, 9], sizes = [16, 1], strides = [1, 1]} : vector<16x16xf32> to vector<16x1xf32>
    %106 = vector.broadcast %105 : vector<16x1xf32> to vector<16x128xf32>
    %107 = arith.addf %104, %106 : vector<16x128xf32>
    %108 = arith.maximumf %99, %107 : vector<16x128xf32>
    %109 = vector.extract_strided_slice %1 {offsets = [0, 10], sizes = [16, 1], strides = [1, 1]} : vector<16x16xf32> to vector<16x1xf32>
    %110 = vector.extract_strided_slice %13 {offsets = [10, 0], sizes = [1, 128], strides = [1, 1]} : vector<16x128xf32> to vector<1x128xf32>
    %111 = vector.broadcast %109 : vector<16x1xf32> to vector<16x128xf32>
    %112 = vector.broadcast %110 : vector<1x128xf32> to vector<16x128xf32>
    %113 = arith.mulf %111, %112 : vector<16x128xf32>
    %114 = vector.extract_strided_slice %17 {offsets = [0, 10], sizes = [16, 1], strides = [1, 1]} : vector<16x16xf32> to vector<16x1xf32>
    %115 = vector.broadcast %114 : vector<16x1xf32> to vector<16x128xf32>
    %116 = arith.addf %113, %115 : vector<16x128xf32>
    %117 = arith.maximumf %108, %116 : vector<16x128xf32>
    %118 = vector.extract_strided_slice %1 {offsets = [0, 11], sizes = [16, 1], strides = [1, 1]} : vector<16x16xf32> to vector<16x1xf32>
    %119 = vector.extract_strided_slice %13 {offsets = [11, 0], sizes = [1, 128], strides = [1, 1]} : vector<16x128xf32> to vector<1x128xf32>
    %120 = vector.broadcast %118 : vector<16x1xf32> to vector<16x128xf32>
    %121 = vector.broadcast %119 : vector<1x128xf32> to vector<16x128xf32>
    %122 = arith.mulf %120, %121 : vector<16x128xf32>
    %123 = vector.extract_strided_slice %17 {offsets = [0, 11], sizes = [16, 1], strides = [1, 1]} : vector<16x16xf32> to vector<16x1xf32>
    %124 = vector.broadcast %123 : vector<16x1xf32> to vector<16x128xf32>
    %125 = arith.addf %122, %124 : vector<16x128xf32>
    %126 = arith.maximumf %117, %125 : vector<16x128xf32>
    %127 = vector.extract_strided_slice %1 {offsets = [0, 12], sizes = [16, 1], strides = [1, 1]} : vector<16x16xf32> to vector<16x1xf32>
    %128 = vector.extract_strided_slice %13 {offsets = [12, 0], sizes = [1, 128], strides = [1, 1]} : vector<16x128xf32> to vector<1x128xf32>
    %129 = vector.broadcast %127 : vector<16x1xf32> to vector<16x128xf32>
    %130 = vector.broadcast %128 : vector<1x128xf32> to vector<16x128xf32>
    %131 = arith.mulf %129, %130 : vector<16x128xf32>
    %132 = vector.extract_strided_slice %17 {offsets = [0, 12], sizes = [16, 1], strides = [1, 1]} : vector<16x16xf32> to vector<16x1xf32>
    %133 = vector.broadcast %132 : vector<16x1xf32> to vector<16x128xf32>
    %134 = arith.addf %131, %133 : vector<16x128xf32>
    %135 = arith.maximumf %126, %134 : vector<16x128xf32>
    %136 = vector.extract_strided_slice %1 {offsets = [0, 13], sizes = [16, 1], strides = [1, 1]} : vector<16x16xf32> to vector<16x1xf32>
    %137 = vector.extract_strided_slice %13 {offsets = [13, 0], sizes = [1, 128], strides = [1, 1]} : vector<16x128xf32> to vector<1x128xf32>
    %138 = vector.broadcast %136 : vector<16x1xf32> to vector<16x128xf32>
    %139 = vector.broadcast %137 : vector<1x128xf32> to vector<16x128xf32>
    %140 = arith.mulf %138, %139 : vector<16x128xf32>
    %141 = vector.extract_strided_slice %17 {offsets = [0, 13], sizes = [16, 1], strides = [1, 1]} : vector<16x16xf32> to vector<16x1xf32>
    %142 = vector.broadcast %141 : vector<16x1xf32> to vector<16x128xf32>
    %143 = arith.addf %140, %142 : vector<16x128xf32>
    %144 = arith.maximumf %135, %143 : vector<16x128xf32>
    %145 = vector.extract_strided_slice %1 {offsets = [0, 14], sizes = [16, 1], strides = [1, 1]} : vector<16x16xf32> to vector<16x1xf32>
    %146 = vector.extract_strided_slice %13 {offsets = [14, 0], sizes = [1, 128], strides = [1, 1]} : vector<16x128xf32> to vector<1x128xf32>
    %147 = vector.broadcast %145 : vector<16x1xf32> to vector<16x128xf32>
    %148 = vector.broadcast %146 : vector<1x128xf32> to vector<16x128xf32>
    %149 = arith.mulf %147, %148 : vector<16x128xf32>
    %150 = vector.extract_strided_slice %17 {offsets = [0, 14], sizes = [16, 1], strides = [1, 1]} : vector<16x16xf32> to vector<16x1xf32>
    %151 = vector.broadcast %150 : vector<16x1xf32> to vector<16x128xf32>
    %152 = arith.addf %149, %151 : vector<16x128xf32>
    %153 = arith.maximumf %144, %152 : vector<16x128xf32>
    %154 = vector.extract_strided_slice %1 {offsets = [0, 15], sizes = [16, 1], strides = [1, 1]} : vector<16x16xf32> to vector<16x1xf32>
    %155 = vector.extract_strided_slice %13 {offsets = [15, 0], sizes = [1, 128], strides = [1, 1]} : vector<16x128xf32> to vector<1x128xf32>
    %156 = vector.broadcast %154 : vector<16x1xf32> to vector<16x128xf32>
    %157 = vector.broadcast %155 : vector<1x128xf32> to vector<16x128xf32>
    %158 = arith.mulf %156, %157 : vector<16x128xf32>
    %159 = vector.extract_strided_slice %17 {offsets = [0, 15], sizes = [16, 1], strides = [1, 1]} : vector<16x16xf32> to vector<16x1xf32>
    %160 = vector.broadcast %159 : vector<16x1xf32> to vector<16x128xf32>
    %161 = arith.addf %158, %160 : vector<16x128xf32>
    %162 = arith.maximumf %153, %161 : vector<16x128xf32>
    %cst_21 = arith.constant dense<0.000000e+00> : vector<16xf32>
    %163 = vector.multi_reduction <add>, %2, %cst_21 [1] : vector<16x16xf32> to vector<16xf32>
    %164 = vector.shape_cast %163 : vector<16xf32> to vector<16x1xf32>
    %cst_22 = arith.constant 0.000000e+00 : f32
    %165 = vector.broadcast %cst_22 : f32 to vector<16x1xf32>
    %166 = arith.cmpf ogt, %164, %165 : vector<16x1xf32>
    %cst_23 = arith.constant 0.000000e+00 : f32
    %167 = vector.shape_cast %166 : vector<16x1xi1> to vector<16x1xi1>
    %168 = vector.broadcast %167 : vector<16x1xi1> to vector<16x128xi1>
    %169 = vector.broadcast %cst_23 : f32 to vector<16x128xf32>
    %170 = arith.select %168, %162, %169 : vector<16x128xi1>, vector<16x128xf32>
    %cst_24 = arith.constant dense<0.000000e+00> : vector<16x128xf32>
    %171 = tpu.matmul %0, %5, %cst_24 {dimension_numbers = #tpu.dot_dimension_numbers<[1], [0], [0], [1], [0, 0, 1, 1], [], []>} : vector<16x128xf32>, vector<128x128xf32>, vector<16x128xf32> -> vector<16x128xf32>
    %172 = vector.broadcast %6 : vector<1x128xf32> to vector<16x128xf32>
    %173 = arith.addf %171, %172 : vector<16x128xf32>
    %cst_25 = arith.constant dense<0.000000e+00> : vector<16x128xf32>
    %174 = tpu.matmul %170, %7, %cst_25 {dimension_numbers = #tpu.dot_dimension_numbers<[1], [0], [0], [1], [0, 0, 1, 1], [], []>} : vector<16x128xf32>, vector<128x128xf32>, vector<16x128xf32> -> vector<16x128xf32>
    %175 = arith.addf %173, %174 : vector<16x128xf32>
    %176 = vector.broadcast %8 : vector<1x128xf32> to vector<16x128xf32>
    %177 = arith.addf %175, %176 : vector<16x128xf32>
    %cst_26 = arith.constant 0.000000e+00 : f32
    %178 = vector.broadcast %cst_26 : f32 to vector<16x128xf32>
    %179 = arith.maximumf %177, %178 : vector<16x128xf32>
    %c0_27 = arith.constant 0 : index
    %c0_28 = arith.constant 0 : index
    %180 = vector.load %arg3[%c0_27, %c0_28] : memref<8x16xf32, #tpu.memory_space<vmem>>, vector<8x16xf32>
    %c0_29 = arith.constant 0 : index
    %c0_30 = arith.constant 0 : index
    %181 = vector.load %arg4[%c0_29, %c0_30] : memref<8x16xf32, #tpu.memory_space<vmem>>, vector<8x16xf32>
    %c0_31 = arith.constant 0 : index
    %c0_32 = arith.constant 0 : index
    %182 = vector.load %arg11[%c0_31, %c0_32] : memref<128x128xf32, #tpu.memory_space<vmem>>, vector<128x128xf32>
    %c0_33 = arith.constant 0 : index
    %c0_34 = arith.constant 0 : index
    %183 = vector.load %arg12[%c0_33, %c0_34] : memref<1x128xf32, #tpu.memory_space<vmem>>, vector<1x128xf32>
    %c0_35 = arith.constant 0 : index
    %c0_36 = arith.constant 0 : index
    %184 = vector.load %arg13[%c0_35, %c0_36] : memref<128x128xf32, #tpu.memory_space<vmem>>, vector<128x128xf32>
    %c0_37 = arith.constant 0 : index
    %c0_38 = arith.constant 0 : index
    %185 = vector.load %arg14[%c0_37, %c0_38] : memref<1x128xf32, #tpu.memory_space<vmem>>, vector<1x128xf32>
    %c0_39 = arith.constant 0 : index
    %c0_40 = arith.constant 0 : index
    %186 = vector.load %arg15[%c0_39, %c0_40] : memref<128x128xf32, #tpu.memory_space<vmem>>, vector<128x128xf32>
    %c0_41 = arith.constant 0 : index
    %c0_42 = arith.constant 0 : index
    %187 = vector.load %arg16[%c0_41, %c0_42] : memref<1x128xf32, #tpu.memory_space<vmem>>, vector<1x128xf32>
    %188 = vector.extract_strided_slice %179 {offsets = [0, 0], sizes = [8, 128], strides = [1, 1]} : vector<16x128xf32> to vector<8x128xf32>
    %cst_43 = arith.constant dense<0.000000e+00> : vector<16x128xf32>
    %189 = tpu.matmul %179, %182, %cst_43 {dimension_numbers = #tpu.dot_dimension_numbers<[1], [0], [0], [1], [0, 0, 1, 1], [], []>} : vector<16x128xf32>, vector<128x128xf32>, vector<16x128xf32> -> vector<16x128xf32>
    %190 = vector.broadcast %183 : vector<1x128xf32> to vector<16x128xf32>
    %191 = arith.addf %189, %190 : vector<16x128xf32>
    %cst_44 = arith.constant 0.000000e+00 : f32
    %192 = vector.broadcast %cst_44 : f32 to vector<16x128xf32>
    %193 = arith.maximumf %191, %192 : vector<16x128xf32>
    %cst_45 = arith.constant 1.000000e+00 : f32
    %194 = vector.broadcast %cst_45 : f32 to vector<8x16xf32>
    %195 = arith.subf %181, %194 : vector<8x16xf32>
    %cst_46 = arith.constant 1.000000e+30 : f32
    %196 = vector.broadcast %cst_46 : f32 to vector<8x16xf32>
    %197 = arith.mulf %195, %196 : vector<8x16xf32>
    %cst_47 = arith.constant -1.000000e+30 : f32
    %198 = vector.broadcast %cst_47 : f32 to vector<8x128xf32>
    %199 = vector.extract_strided_slice %180 {offsets = [0, 0], sizes = [8, 1], strides = [1, 1]} : vector<8x16xf32> to vector<8x1xf32>
    %200 = vector.extract_strided_slice %193 {offsets = [0, 0], sizes = [1, 128], strides = [1, 1]} : vector<16x128xf32> to vector<1x128xf32>
    %201 = vector.broadcast %199 : vector<8x1xf32> to vector<8x128xf32>
    %202 = vector.broadcast %200 : vector<1x128xf32> to vector<8x128xf32>
    %203 = arith.mulf %201, %202 : vector<8x128xf32>
    %204 = vector.extract_strided_slice %197 {offsets = [0, 0], sizes = [8, 1], strides = [1, 1]} : vector<8x16xf32> to vector<8x1xf32>
    %205 = vector.broadcast %204 : vector<8x1xf32> to vector<8x128xf32>
    %206 = arith.addf %203, %205 : vector<8x128xf32>
    %207 = arith.maximumf %198, %206 : vector<8x128xf32>
    %208 = vector.extract_strided_slice %180 {offsets = [0, 1], sizes = [8, 1], strides = [1, 1]} : vector<8x16xf32> to vector<8x1xf32>
    %209 = vector.extract_strided_slice %193 {offsets = [1, 0], sizes = [1, 128], strides = [1, 1]} : vector<16x128xf32> to vector<1x128xf32>
    %210 = vector.broadcast %208 : vector<8x1xf32> to vector<8x128xf32>
    %211 = vector.broadcast %209 : vector<1x128xf32> to vector<8x128xf32>
    %212 = arith.mulf %210, %211 : vector<8x128xf32>
    %213 = vector.extract_strided_slice %197 {offsets = [0, 1], sizes = [8, 1], strides = [1, 1]} : vector<8x16xf32> to vector<8x1xf32>
    %214 = vector.broadcast %213 : vector<8x1xf32> to vector<8x128xf32>
    %215 = arith.addf %212, %214 : vector<8x128xf32>
    %216 = arith.maximumf %207, %215 : vector<8x128xf32>
    %217 = vector.extract_strided_slice %180 {offsets = [0, 2], sizes = [8, 1], strides = [1, 1]} : vector<8x16xf32> to vector<8x1xf32>
    %218 = vector.extract_strided_slice %193 {offsets = [2, 0], sizes = [1, 128], strides = [1, 1]} : vector<16x128xf32> to vector<1x128xf32>
    %219 = vector.broadcast %217 : vector<8x1xf32> to vector<8x128xf32>
    %220 = vector.broadcast %218 : vector<1x128xf32> to vector<8x128xf32>
    %221 = arith.mulf %219, %220 : vector<8x128xf32>
    %222 = vector.extract_strided_slice %197 {offsets = [0, 2], sizes = [8, 1], strides = [1, 1]} : vector<8x16xf32> to vector<8x1xf32>
    %223 = vector.broadcast %222 : vector<8x1xf32> to vector<8x128xf32>
    %224 = arith.addf %221, %223 : vector<8x128xf32>
    %225 = arith.maximumf %216, %224 : vector<8x128xf32>
    %226 = vector.extract_strided_slice %180 {offsets = [0, 3], sizes = [8, 1], strides = [1, 1]} : vector<8x16xf32> to vector<8x1xf32>
    %227 = vector.extract_strided_slice %193 {offsets = [3, 0], sizes = [1, 128], strides = [1, 1]} : vector<16x128xf32> to vector<1x128xf32>
    %228 = vector.broadcast %226 : vector<8x1xf32> to vector<8x128xf32>
    %229 = vector.broadcast %227 : vector<1x128xf32> to vector<8x128xf32>
    %230 = arith.mulf %228, %229 : vector<8x128xf32>
    %231 = vector.extract_strided_slice %197 {offsets = [0, 3], sizes = [8, 1], strides = [1, 1]} : vector<8x16xf32> to vector<8x1xf32>
    %232 = vector.broadcast %231 : vector<8x1xf32> to vector<8x128xf32>
    %233 = arith.addf %230, %232 : vector<8x128xf32>
    %234 = arith.maximumf %225, %233 : vector<8x128xf32>
    %235 = vector.extract_strided_slice %180 {offsets = [0, 4], sizes = [8, 1], strides = [1, 1]} : vector<8x16xf32> to vector<8x1xf32>
    %236 = vector.extract_strided_slice %193 {offsets = [4, 0], sizes = [1, 128], strides = [1, 1]} : vector<16x128xf32> to vector<1x128xf32>
    %237 = vector.broadcast %235 : vector<8x1xf32> to vector<8x128xf32>
    %238 = vector.broadcast %236 : vector<1x128xf32> to vector<8x128xf32>
    %239 = arith.mulf %237, %238 : vector<8x128xf32>
    %240 = vector.extract_strided_slice %197 {offsets = [0, 4], sizes = [8, 1], strides = [1, 1]} : vector<8x16xf32> to vector<8x1xf32>
    %241 = vector.broadcast %240 : vector<8x1xf32> to vector<8x128xf32>
    %242 = arith.addf %239, %241 : vector<8x128xf32>
    %243 = arith.maximumf %234, %242 : vector<8x128xf32>
    %244 = vector.extract_strided_slice %180 {offsets = [0, 5], sizes = [8, 1], strides = [1, 1]} : vector<8x16xf32> to vector<8x1xf32>
    %245 = vector.extract_strided_slice %193 {offsets = [5, 0], sizes = [1, 128], strides = [1, 1]} : vector<16x128xf32> to vector<1x128xf32>
    %246 = vector.broadcast %244 : vector<8x1xf32> to vector<8x128xf32>
    %247 = vector.broadcast %245 : vector<1x128xf32> to vector<8x128xf32>
    %248 = arith.mulf %246, %247 : vector<8x128xf32>
    %249 = vector.extract_strided_slice %197 {offsets = [0, 5], sizes = [8, 1], strides = [1, 1]} : vector<8x16xf32> to vector<8x1xf32>
    %250 = vector.broadcast %249 : vector<8x1xf32> to vector<8x128xf32>
    %251 = arith.addf %248, %250 : vector<8x128xf32>
    %252 = arith.maximumf %243, %251 : vector<8x128xf32>
    %253 = vector.extract_strided_slice %180 {offsets = [0, 6], sizes = [8, 1], strides = [1, 1]} : vector<8x16xf32> to vector<8x1xf32>
    %254 = vector.extract_strided_slice %193 {offsets = [6, 0], sizes = [1, 128], strides = [1, 1]} : vector<16x128xf32> to vector<1x128xf32>
    %255 = vector.broadcast %253 : vector<8x1xf32> to vector<8x128xf32>
    %256 = vector.broadcast %254 : vector<1x128xf32> to vector<8x128xf32>
    %257 = arith.mulf %255, %256 : vector<8x128xf32>
    %258 = vector.extract_strided_slice %197 {offsets = [0, 6], sizes = [8, 1], strides = [1, 1]} : vector<8x16xf32> to vector<8x1xf32>
    %259 = vector.broadcast %258 : vector<8x1xf32> to vector<8x128xf32>
    %260 = arith.addf %257, %259 : vector<8x128xf32>
    %261 = arith.maximumf %252, %260 : vector<8x128xf32>
    %262 = vector.extract_strided_slice %180 {offsets = [0, 7], sizes = [8, 1], strides = [1, 1]} : vector<8x16xf32> to vector<8x1xf32>
    %263 = vector.extract_strided_slice %193 {offsets = [7, 0], sizes = [1, 128], strides = [1, 1]} : vector<16x128xf32> to vector<1x128xf32>
    %264 = vector.broadcast %262 : vector<8x1xf32> to vector<8x128xf32>
    %265 = vector.broadcast %263 : vector<1x128xf32> to vector<8x128xf32>
    %266 = arith.mulf %264, %265 : vector<8x128xf32>
    %267 = vector.extract_strided_slice %197 {offsets = [0, 7], sizes = [8, 1], strides = [1, 1]} : vector<8x16xf32> to vector<8x1xf32>
    %268 = vector.broadcast %267 : vector<8x1xf32> to vector<8x128xf32>
    %269 = arith.addf %266, %268 : vector<8x128xf32>
    %270 = arith.maximumf %261, %269 : vector<8x128xf32>
    %271 = vector.extract_strided_slice %180 {offsets = [0, 8], sizes = [8, 1], strides = [1, 1]} : vector<8x16xf32> to vector<8x1xf32>
    %272 = vector.extract_strided_slice %193 {offsets = [8, 0], sizes = [1, 128], strides = [1, 1]} : vector<16x128xf32> to vector<1x128xf32>
    %273 = vector.broadcast %271 : vector<8x1xf32> to vector<8x128xf32>
    %274 = vector.broadcast %272 : vector<1x128xf32> to vector<8x128xf32>
    %275 = arith.mulf %273, %274 : vector<8x128xf32>
    %276 = vector.extract_strided_slice %197 {offsets = [0, 8], sizes = [8, 1], strides = [1, 1]} : vector<8x16xf32> to vector<8x1xf32>
    %277 = vector.broadcast %276 : vector<8x1xf32> to vector<8x128xf32>
    %278 = arith.addf %275, %277 : vector<8x128xf32>
    %279 = arith.maximumf %270, %278 : vector<8x128xf32>
    %280 = vector.extract_strided_slice %180 {offsets = [0, 9], sizes = [8, 1], strides = [1, 1]} : vector<8x16xf32> to vector<8x1xf32>
    %281 = vector.extract_strided_slice %193 {offsets = [9, 0], sizes = [1, 128], strides = [1, 1]} : vector<16x128xf32> to vector<1x128xf32>
    %282 = vector.broadcast %280 : vector<8x1xf32> to vector<8x128xf32>
    %283 = vector.broadcast %281 : vector<1x128xf32> to vector<8x128xf32>
    %284 = arith.mulf %282, %283 : vector<8x128xf32>
    %285 = vector.extract_strided_slice %197 {offsets = [0, 9], sizes = [8, 1], strides = [1, 1]} : vector<8x16xf32> to vector<8x1xf32>
    %286 = vector.broadcast %285 : vector<8x1xf32> to vector<8x128xf32>
    %287 = arith.addf %284, %286 : vector<8x128xf32>
    %288 = arith.maximumf %279, %287 : vector<8x128xf32>
    %289 = vector.extract_strided_slice %180 {offsets = [0, 10], sizes = [8, 1], strides = [1, 1]} : vector<8x16xf32> to vector<8x1xf32>
    %290 = vector.extract_strided_slice %193 {offsets = [10, 0], sizes = [1, 128], strides = [1, 1]} : vector<16x128xf32> to vector<1x128xf32>
    %291 = vector.broadcast %289 : vector<8x1xf32> to vector<8x128xf32>
    %292 = vector.broadcast %290 : vector<1x128xf32> to vector<8x128xf32>
    %293 = arith.mulf %291, %292 : vector<8x128xf32>
    %294 = vector.extract_strided_slice %197 {offsets = [0, 10], sizes = [8, 1], strides = [1, 1]} : vector<8x16xf32> to vector<8x1xf32>
    %295 = vector.broadcast %294 : vector<8x1xf32> to vector<8x128xf32>
    %296 = arith.addf %293, %295 : vector<8x128xf32>
    %297 = arith.maximumf %288, %296 : vector<8x128xf32>
    %298 = vector.extract_strided_slice %180 {offsets = [0, 11], sizes = [8, 1], strides = [1, 1]} : vector<8x16xf32> to vector<8x1xf32>
    %299 = vector.extract_strided_slice %193 {offsets = [11, 0], sizes = [1, 128], strides = [1, 1]} : vector<16x128xf32> to vector<1x128xf32>
    %300 = vector.broadcast %298 : vector<8x1xf32> to vector<8x128xf32>
    %301 = vector.broadcast %299 : vector<1x128xf32> to vector<8x128xf32>
    %302 = arith.mulf %300, %301 : vector<8x128xf32>
    %303 = vector.extract_strided_slice %197 {offsets = [0, 11], sizes = [8, 1], strides = [1, 1]} : vector<8x16xf32> to vector<8x1xf32>
    %304 = vector.broadcast %303 : vector<8x1xf32> to vector<8x128xf32>
    %305 = arith.addf %302, %304 : vector<8x128xf32>
    %306 = arith.maximumf %297, %305 : vector<8x128xf32>
    %cst_48 = arith.constant dense<0.000000e+00> : vector<8xf32>
    %307 = vector.multi_reduction <add>, %181, %cst_48 [1] : vector<8x16xf32> to vector<8xf32>
    %308 = vector.shape_cast %307 : vector<8xf32> to vector<8x1xf32>
    %cst_49 = arith.constant 0.000000e+00 : f32
    %309 = vector.broadcast %cst_49 : f32 to vector<8x1xf32>
    %310 = arith.cmpf ogt, %308, %309 : vector<8x1xf32>
    %cst_50 = arith.constant 0.000000e+00 : f32
    %311 = vector.shape_cast %310 : vector<8x1xi1> to vector<8x1xi1>
    %312 = vector.broadcast %311 : vector<8x1xi1> to vector<8x128xi1>
    %313 = vector.broadcast %cst_50 : f32 to vector<8x128xf32>
    %314 = arith.select %312, %306, %313 : vector<8x128xi1>, vector<8x128xf32>
    %cst_51 = arith.constant dense<0.000000e+00> : vector<8x128xf32>
    %315 = tpu.matmul %188, %184, %cst_51 {dimension_numbers = #tpu.dot_dimension_numbers<[1], [0], [0], [1], [0, 0, 1, 1], [], []>} : vector<8x128xf32>, vector<128x128xf32>, vector<8x128xf32> -> vector<8x128xf32>
    %316 = vector.broadcast %185 : vector<1x128xf32> to vector<8x128xf32>
    %317 = arith.addf %315, %316 : vector<8x128xf32>
    %cst_52 = arith.constant dense<0.000000e+00> : vector<8x128xf32>
    %318 = tpu.matmul %314, %186, %cst_52 {dimension_numbers = #tpu.dot_dimension_numbers<[1], [0], [0], [1], [0, 0, 1, 1], [], []>} : vector<8x128xf32>, vector<128x128xf32>, vector<8x128xf32> -> vector<8x128xf32>
    %319 = arith.addf %317, %318 : vector<8x128xf32>
    %320 = vector.broadcast %187 : vector<1x128xf32> to vector<8x128xf32>
    %321 = arith.addf %319, %320 : vector<8x128xf32>
    %c0_53 = arith.constant 0 : index
    %c0_54 = arith.constant 0 : index
    %322 = vector.load %arg17[%c0_53, %c0_54] : memref<8x128xf32, #tpu.memory_space<vmem>>, vector<8x128xf32>
    tpu.vector_store %arg17[%c0_53, %c0_54], %321 {strides = array<i32>} : memref<8x128xf32, #tpu.memory_space<vmem>>, vector<8x128xf32>,
    return
  }
}

</mosaic_0001>

<llo_original>
// kernel: tpu_custom_call.1
$region0: #{tpu_custom_call.1}
  #allocation0 [shape = 'u32[]', space=smem, size = 0x4, offset = 0x4, fixed_abs, tag = 'smem constant byte address 0x4 - core index']
  #allocation1 [shape = 'u32[72,128]{1,0:T(1,128)}', space=vmem, size = 0x9000, scoped, tag = 'internal scratch']
  %s0 = inlined_call_operand.hbm [shape: f32[16,128], index: 0, kind: input, shape index: {}]
  %s1 = inlined_call_operand.hbm [shape: f32[16,16], index: 1, kind: input, shape index: {}]
  %s2 = inlined_call_operand.hbm [shape: f32[16,16], index: 2, kind: input, shape index: {}]
  %s3 = inlined_call_operand.hbm [shape: f32[8,16], index: 3, kind: input, shape index: {}]
  %s4 = inlined_call_operand.hbm [shape: f32[8,16], index: 4, kind: input, shape index: {}]
  %s5 = inlined_call_operand.hbm [shape: f32[128,128], index: 5, kind: input, shape index: {}]
  %s6 = inlined_call_operand.vmem [shape: f32[1,128], index: 6, kind: input, shape index: {}]
  %s7 = inlined_call_operand.hbm [shape: f32[128,128], index: 7, kind: input, shape index: {}]
  %s8 = inlined_call_operand.vmem [shape: f32[1,128], index: 8, kind: input, shape index: {}]
  %s9 = inlined_call_operand.hbm [shape: f32[128,128], index: 9, kind: input, shape index: {}]
  %s10 = inlined_call_operand.vmem [shape: f32[1,128], index: 10, kind: input, shape index: {}]
  %s11 = inlined_call_operand.hbm [shape: f32[128,128], index: 11, kind: input, shape index: {}]
  %s12 = inlined_call_operand.vmem [shape: f32[1,128], index: 12, kind: input, shape index: {}]
  %s13 = inlined_call_operand.hbm [shape: f32[128,128], index: 13, kind: input, shape index: {}]
  %s14 = inlined_call_operand.vmem [shape: f32[1,128], index: 14, kind: input, shape index: {}]
  %s15 = inlined_call_operand.hbm [shape: f32[128,128], index: 15, kind: input, shape index: {}]
  %s16 = inlined_call_operand.vmem [shape: f32[1,128], index: 16, kind: input, shape index: {}]
  %s17 = inlined_call_operand.hbm [shape: f32[8,128], index: 17, kind: output, shape index: {}]
  %s18 = sld [smem:[#allocation0]]
  $region122: #{tpu_custom_call.1} parent=0
    _
  %s20 = ssub.s32 1, %s18
  %s21 = scalar_select 0, %s20, %s18
  $region1: #{tpu_custom_call.1} parent=0
    #allocation2 [shape = 'u8[8192]{0}', space=vmem, size = 0x2000, scoped, tag = 'input window, operand 0, single buffered']
    #allocation3 [shape = 's32[1]{0}', space=sflag, size = 0x4, scoped, tag = 'scoped memory for tpu_custom_call.1']
    #allocation4 [shape = 's32[1]{0}', space=sflag, size = 0x4, scoped, tag = 'scoped memory for tpu_custom_call.1']
    #allocation5 [shape = 'u8[8192]{0}', space=vmem, size = 0x2000, scoped, tag = 'input window, operand 1, single buffered']
    #allocation6 [shape = 's32[1]{0}', space=sflag, size = 0x4, scoped, tag = 'scoped memory for tpu_custom_call.1']
    #allocation7 [shape = 'u8[8192]{0}', space=vmem, size = 0x2000, scoped, tag = 'input window, operand 2, single buffered']
    #allocation8 [shape = 'u8[4096]{0}', space=vmem, size = 0x1000, scoped, tag = 'input window, operand 3, single buffered']
    #allocation9 [shape = 's32[1]{0}', space=sflag, size = 0x4, scoped, tag = 'scoped memory for tpu_custom_call.1']
    #allocation10 [shape = 'u8[4096]{0}', space=vmem, size = 0x1000, scoped, tag = 'input window, operand 4, single buffered']
    #allocation11 [shape = 'u8[65536]{0}', space=vmem, size = 0x10000, scoped, tag = 'input window, operand 5, single buffered']
    #allocation12 [shape = 's32[1]{0}', space=sflag, size = 0x4, scoped, tag = 'scoped memory for tpu_custom_call.1']
    #allocation13 [shape = 'u8[65536]{0}', space=vmem, size = 0x10000, scoped, tag = 'input window, operand 7, single buffered']
    #allocation14 [shape = 'u8[65536]{0}', space=vmem, size = 0x10000, scoped, tag = 'input window, operand 9, single buffered']
    #allocation15 [shape = 's32[1]{0}', space=sflag, size = 0x4, scoped, tag = 'scoped memory for tpu_custom_call.1']
    #allocation16 [shape = 'u8[65536]{0}', space=vmem, size = 0x10000, scoped, tag = 'input window, operand 11, single buffered']
    #allocation17 [shape = 'u8[65536]{0}', space=vmem, size = 0x10000, scoped, tag = 'input window, operand 13, single buffered']
    #allocation18 [shape = 's32[1]{0}', space=sflag, size = 0x4, scoped, tag = 'scoped memory for tpu_custom_call.1']
    #allocation19 [shape = 'u8[65536]{0}', space=vmem, size = 0x10000, scoped, tag = 'input window, operand 15, single buffered']
    #allocation20 [shape = 'u8[4096]{0}', space=vmem, size = 0x1000, scoped, tag = 'output window, operand 0, single buffered']
    %22 = vsyncpa [#allocation3], 0
    %23 = vsyncpa [#allocation6], 0
    %24 = vsyncpa [#allocation9], 0
    %25 = vsyncpa [#allocation12], 0
    %26 = vsyncpa [#allocation15], 0
    %27 = vsyncpa [#allocation18], 0
    %28 = vsyncpa [#allocation4], 0
    // Predicated region
    $region2: #{tpu_custom_call.1} parent=1 // pred_check
      _
    $region3: #{tpu_custom_call.1} parent=1 // pred_check_branch
      %30 = sbr.rel (0) target = $region5
    $region4: #{tpu_custom_call.1} parent=1 // pred_region
      %32 = vsyncadd [#allocation3], 0
      %s33 = sshll.u32 %s0, 4
      %s34 = int_to_ptr.hbm [resolvable:$true] %s33
      %s35 = sshll.u32 [#allocation2], 4
      %s36 = int_to_ptr.vmem [resolvable:$true] %s35
      %41 = dma.hbm_to_vmem [thread:$0]  %s34, 256, %s36, [#allocation3], 128, 128, 8
    $region5: #{tpu_custom_call.1} parent=1 // pred_fallthru
      _
    // Predicated region
    $region6: #{tpu_custom_call.1} parent=1 // pred_check
      _
    $region7: #{tpu_custom_call.1} parent=1 // pred_check_branch
      %43 = sbr.rel (0) target = $region9
    $region8: #{tpu_custom_call.1} parent=1 // pred_region
      %45 = vsyncadd [#allocation6], 0
      %s46 = sshll.u32 %s1, 4
      %s47 = int_to_ptr.hbm [resolvable:$true] %s46
      %s48 = sshll.u32 [#allocation5], 4
      %s49 = int_to_ptr.vmem [resolvable:$true] %s48
      %54 = dma.hbm_to_vmem [thread:$0]  %s47, 256, %s49, [#allocation6], 128, 128, 8
    $region9: #{tpu_custom_call.1} parent=1 // pred_fallthru
      _
    // Predicated region
    $region10: #{tpu_custom_call.1} parent=1 // pred_check
      _
    $region11: #{tpu_custom_call.1} parent=1 // pred_check_branch
      %56 = sbr.rel (0) target = $region13
    $region12: #{tpu_custom_call.1} parent=1 // pred_region
      %58 = vsyncadd [#allocation6], 0
      %s59 = sshll.u32 %s2, 4
      %s60 = int_to_ptr.hbm [resolvable:$true] %s59
      %s61 = sshll.u32 [#allocation7], 4
      %s62 = int_to_ptr.vmem [resolvable:$true] %s61
      %67 = dma.hbm_to_vmem [thread:$0]  %s60, 256, %s62, [#allocation6], 128, 128, 8
    $region13: #{tpu_custom_call.1} parent=1 // pred_fallthru
      _
    // Predicated region
    $region14: #{tpu_custom_call.1} parent=1 // pred_check
      _
    $region15: #{tpu_custom_call.1} parent=1 // pred_check_branch
      %69 = sbr.rel (0) target = $region17
    $region16: #{tpu_custom_call.1} parent=1 // pred_region
      %71 = vsyncadd [#allocation9], 0
      %s73 = sshll.u32 %s3, 4
      %s74 = int_to_ptr.hbm [resolvable:$true] %s73
      %s75 = sshll.u32 [#allocation8], 4
      %s76 = int_to_ptr.vmem [resolvable:$true] %s75
      %78 = dma.hbm_to_vmem [thread:$0]  %s74, 128, %s76, [#allocation9]
    $region17: #{tpu_custom_call.1} parent=1 // pred_fallthru
      _
    // Predicated region
    $region18: #{tpu_custom_call.1} parent=1 // pred_check
      _
    $region19: #{tpu_custom_call.1} parent=1 // pred_check_branch
      %80 = sbr.rel (0) target = $region21
    $region20: #{tpu_custom_call.1} parent=1 // pred_region
      %82 = vsyncadd [#allocation9], 0
      %s84 = sshll.u32 %s4, 4
      %s85 = int_to_ptr.hbm [resolvable:$true] %s84
      %s86 = sshll.u32 [#allocation10], 4
      %s87 = int_to_ptr.vmem [resolvable:$true] %s86
      %89 = dma.hbm_to_vmem [thread:$0]  %s85, 128, %s87, [#allocation9]
    $region21: #{tpu_custom_call.1} parent=1 // pred_fallthru
      _
    // Predicated region
    $region22: #{tpu_custom_call.1} parent=1 // pred_check
      _
    $region23: #{tpu_custom_call.1} parent=1 // pred_check_branch
      %91 = sbr.rel (0) target = $region25
    $region24: #{tpu_custom_call.1} parent=1 // pred_region
      %93 = vsyncadd [#allocation12], 0
      %s94 = sshll.u32 %s5, 4
      %s95 = int_to_ptr.hbm [resolvable:$true] %s94
      %s96 = sshll.u32 [#allocation11], 4
      %s97 = int_to_ptr.vmem [resolvable:$true] %s96
      %102 = dma.hbm_to_vmem [thread:$0]  %s95, 2048, %s97, [#allocation12], 128, 128, 8
    $region25: #{tpu_custom_call.1} parent=1 // pred_fallthru
      _
    // Predicated region
    $region26: #{tpu_custom_call.1} parent=1 // pred_check
      _
    $region27: #{tpu_custom_call.1} parent=1 // pred_check_branch
      %104 = sbr.rel (0) target = $region29
    $region28: #{tpu_custom_call.1} parent=1 // pred_region
      _
    $region29: #{tpu_custom_call.1} parent=1 // pred_fallthru
      _
    // Predicated region
    $region30: #{tpu_custom_call.1} parent=1 // pred_check
      _
    $region31: #{tpu_custom_call.1} parent=1 // pred_check_branch
      %106 = sbr.rel (0) target = $region33
    $region32: #{tpu_custom_call.1} parent=1 // pred_region
      %108 = vsyncadd [#allocation12], 0
      %s109 = sshll.u32 %s7, 4
      %s110 = int_to_ptr.hbm [resolvable:$true] %s109
      %s111 = sshll.u32 [#allocation13], 4
      %s112 = int_to_ptr.vmem [resolvable:$true] %s111
      %117 = dma.hbm_to_vmem [thread:$0]  %s110, 2048, %s112, [#allocation12], 128, 128, 8
    $region33: #{tpu_custom_call.1} parent=1 // pred_fallthru
      _
    // Predicated region
    $region34: #{tpu_custom_call.1} parent=1 // pred_check
      _
    $region35: #{tpu_custom_call.1} parent=1 // pred_check_branch
      %119 = sbr.rel (0) target = $region37
    $region36: #{tpu_custom_call.1} parent=1 // pred_region
      _
    $region37: #{tpu_custom_call.1} parent=1 // pred_fallthru
      _
    // Predicated region
    $region38: #{tpu_custom_call.1} parent=1 // pred_check
      _
    $region39: #{tpu_custom_call.1} parent=1 // pred_check_branch
      %121 = sbr.rel (0) target = $region41
    $region40: #{tpu_custom_call.1} parent=1 // pred_region
      %123 = vsyncadd [#allocation15], 0
      %s124 = sshll.u32 %s9, 4
      %s125 = int_to_ptr.hbm [resolvable:$true] %s124
      %s126 = sshll.u32 [#allocation14], 4
      %s127 = int_to_ptr.vmem [resolvable:$true] %s126
      %132 = dma.hbm_to_vmem [thread:$0]  %s125, 2048, %s127, [#allocation15], 128, 128, 8
    $region41: #{tpu_custom_call.1} parent=1 // pred_fallthru
      _
    // Predicated region
    $region42: #{tpu_custom_call.1} parent=1 // pred_check
      _
    $region43: #{tpu_custom_call.1} parent=1 // pred_check_branch
      %134 = sbr.rel (0) target = $region45
    $region44: #{tpu_custom_call.1} parent=1 // pred_region
      _
    $region45: #{tpu_custom_call.1} parent=1 // pred_fallthru
      _
    // Predicated region
    $region46: #{tpu_custom_call.1} parent=1 // pred_check
      _
    $region47: #{tpu_custom_call.1} parent=1 // pred_check_branch
      %136 = sbr.rel (0) target = $region49
    $region48: #{tpu_custom_call.1} parent=1 // pred_region
      %138 = vsyncadd [#allocation15], 0
      %s139 = sshll.u32 %s11, 4
      %s140 = int_to_ptr.hbm [resolvable:$true] %s139
      %s141 = sshll.u32 [#allocation16], 4
      %s142 = int_to_ptr.vmem [resolvable:$true] %s141
      %147 = dma.hbm_to_vmem [thread:$0]  %s140, 2048, %s142, [#allocation15], 128, 128, 8
    $region49: #{tpu_custom_call.1} parent=1 // pred_fallthru
      _
    // Predicated region
    $region50: #{tpu_custom_call.1} parent=1 // pred_check
      _
    $region51: #{tpu_custom_call.1} parent=1 // pred_check_branch
      %149 = sbr.rel (0) target = $region53
    $region52: #{tpu_custom_call.1} parent=1 // pred_region
      _
    $region53: #{tpu_custom_call.1} parent=1 // pred_fallthru
      _
    // Predicated region
    $region54: #{tpu_custom_call.1} parent=1 // pred_check
      _
    $region55: #{tpu_custom_call.1} parent=1 // pred_check_branch
      %151 = sbr.rel (0) target = $region57
    $region56: #{tpu_custom_call.1} parent=1 // pred_region
      %153 = vsyncadd [#allocation18], 0
      %s154 = sshll.u32 %s13, 4
      %s155 = int_to_ptr.hbm [resolvable:$true] %s154
      %s156 = sshll.u32 [#allocation17], 4
      %s157 = int_to_ptr.vmem [resolvable:$true] %s156
      %162 = dma.hbm_to_vmem [thread:$0]  %s155, 2048, %s157, [#allocation18], 128, 128, 8
    $region57: #{tpu_custom_call.1} parent=1 // pred_fallthru
      _
    // Predicated region
    $region58: #{tpu_custom_call.1} parent=1 // pred_check
      _
    $region59: #{tpu_custom_call.1} parent=1 // pred_check_branch
      %164 = sbr.rel (0) target = $region61
    $region60: #{tpu_custom_call.1} parent=1 // pred_region
      _
    $region61: #{tpu_custom_call.1} parent=1 // pred_fallthru
      _
    // Predicated region
    $region62: #{tpu_custom_call.1} parent=1 // pred_check
      _
    $region63: #{tpu_custom_call.1} parent=1 // pred_check_branch
      %166 = sbr.rel (0) target = $region65
    $region64: #{tpu_custom_call.1} parent=1 // pred_region
      %168 = vsyncadd [#allocation18], 0
      %s169 = sshll.u32 %s15, 4
      %s170 = int_to_ptr.hbm [resolvable:$true] %s169
      %s171 = sshll.u32 [#allocation19], 4
      %s172 = int_to_ptr.vmem [resolvable:$true] %s171
      %177 = dma.hbm_to_vmem [thread:$0]  %s170, 2048, %s172, [#allocation18], 128, 128, 8
    $region65: #{tpu_custom_call.1} parent=1 // pred_fallthru
      _
    // Predicated region
    $region66: #{tpu_custom_call.1} parent=1 // pred_check
      _
    $region67: #{tpu_custom_call.1} parent=1 // pred_check_branch
      %179 = sbr.rel (0) target = $region69
    $region68: #{tpu_custom_call.1} parent=1 // pred_region
      _
    $region69: #{tpu_custom_call.1} parent=1 // pred_fallthru
      _
    // Predicated region
    $region70: #{tpu_custom_call.1} parent=1 // pred_check
      _
    $region71: #{tpu_custom_call.1} parent=1 // pred_check_branch
      %181 = sbr.rel (0) target = $region73
    $region72: #{tpu_custom_call.1} parent=1 // pred_region
      %183 = dma.done [#allocation3], 256
    $region73: #{tpu_custom_call.1} parent=1 // pred_fallthru
      _
    // Predicated region
    $region74: #{tpu_custom_call.1} parent=1 // pred_check
      _
    $region75: #{tpu_custom_call.1} parent=1 // pred_check_branch
      %185 = sbr.rel (0) target = $region77
    $region76: #{tpu_custom_call.1} parent=1 // pred_region
      %187 = dma.done [#allocation6], 256
    $region77: #{tpu_custom_call.1} parent=1 // pred_fallthru
      _
    // Predicated region
    $region78: #{tpu_custom_call.1} parent=1 // pred_check
      _
    $region79: #{tpu_custom_call.1} parent=1 // pred_check_branch
      %189 = sbr.rel (0) target = $region81
    $region80: #{tpu_custom_call.1} parent=1 // pred_region
      %191 = dma.done [#allocation6], 256
    $region81: #{tpu_custom_call.1} parent=1 // pred_fallthru
      _
    // Predicated region
    $region82: #{tpu_custom_call.1} parent=1 // pred_check
      _
    $region83: #{tpu_custom_call.1} parent=1 // pred_check_branch
      %193 = sbr.rel (0) target = $region85
    $region84: #{tpu_custom_call.1} parent=1 // pred_region
      %195 = dma.done [#allocation9], 128
    $region85: #{tpu_custom_call.1} parent=1 // pred_fallthru
      _
    // Predicated region
    $region86: #{tpu_custom_call.1} parent=1 // pred_check
      _
    $region87: #{tpu_custom_call.1} parent=1 // pred_check_branch
      %197 = sbr.rel (0) target = $region89
    $region88: #{tpu_custom_call.1} parent=1 // pred_region
      %199 = dma.done [#allocation9], 128
    $region89: #{tpu_custom_call.1} parent=1 // pred_fallthru
      _
    // Predicated region
    $region90: #{tpu_custom_call.1} parent=1 // pred_check
      _
    $region91: #{tpu_custom_call.1} parent=1 // pred_check_branch
      %201 = sbr.rel (0) target = $region93
    $region92: #{tpu_custom_call.1} parent=1 // pred_region
      %203 = dma.done [#allocation12], 2048
    $region93: #{tpu_custom_call.1} parent=1 // pred_fallthru
      _
    // Predicated region
    $region94: #{tpu_custom_call.1} parent=1 // pred_check
      _
    $region95: #{tpu_custom_call.1} parent=1 // pred_check_branch
      %205 = sbr.rel (0) target = $region97
    $region96: #{tpu_custom_call.1} parent=1 // pred_region
      %207 = dma.done [#allocation12], 2048
    $region97: #{tpu_custom_call.1} parent=1 // pred_fallthru
      _
    // Predicated region
    $region98: #{tpu_custom_call.1} parent=1 // pred_check
      _
    $region99: #{tpu_custom_call.1} parent=1 // pred_check_branch
      %209 = sbr.rel (0) target = $region101
    $region100: #{tpu_custom_call.1} parent=1 // pred_region
      %211 = dma.done [#allocation15], 2048
    $region101: #{tpu_custom_call.1} parent=1 // pred_fallthru
      _
    // Predicated region
    $region102: #{tpu_custom_call.1} parent=1 // pred_check
      _
    $region103: #{tpu_custom_call.1} parent=1 // pred_check_branch
      %213 = sbr.rel (0) target = $region105
    $region104: #{tpu_custom_call.1} parent=1 // pred_region
      %215 = dma.done [#allocation15], 2048
    $region105: #{tpu_custom_call.1} parent=1 // pred_fallthru
      _
    // Predicated region
    $region106: #{tpu_custom_call.1} parent=1 // pred_check
      _
    $region107: #{tpu_custom_call.1} parent=1 // pred_check_branch
      %217 = sbr.rel (0) target = $region109
    $region108: #{tpu_custom_call.1} parent=1 // pred_region
      %219 = dma.done [#allocation18], 2048
    $region109: #{tpu_custom_call.1} parent=1 // pred_fallthru
      _
    // Predicated region
    $region110: #{tpu_custom_call.1} parent=1 // pred_check
      _
    $region111: #{tpu_custom_call.1} parent=1 // pred_check_branch
      %221 = sbr.rel (0) target = $region113
    $region112: #{tpu_custom_call.1} parent=1 // pred_region
      %223 = dma.done [#allocation18], 2048
    $region113: #{tpu_custom_call.1} parent=1 // pred_fallthru
      _
    %v224 = vld [vmem:[#allocation2] sm:$0xff]
    %v225 = vld [vmem:[#allocation2 + $0x8] sm:$0xff]
    %v226 = vld [vmem:[#allocation5] sm:$0xff]
    %v227 = vld [vmem:[#allocation5 + $0x8] sm:$0xff]
    %v228 = vld [vmem:[#allocation7] sm:$0xff]
    %v229 = vld [vmem:[#allocation7 + $0x8] sm:$0xff]
    %v230 = vld [vmem:[#allocation11] sm:$0xff]
    %v231 = vld [vmem:[#allocation11 + $0x8] sm:$0xff]
    %v232 = vld [vmem:[#allocation11 + $0x10] sm:$0xff]
    %v233 = vld [vmem:[#allocation11 + $0x18] sm:$0xff]
    %v234 = vld [vmem:[#allocation11 + $0x20] sm:$0xff]
    %v235 = vld [vmem:[#allocation11 + $0x28] sm:$0xff]
    %v236 = vld [vmem:[#allocation11 + $0x30] sm:$0xff]
    %v237 = vld [vmem:[#allocation11 + $0x38] sm:$0xff]
    %v238 = vld [vmem:[#allocation11 + $0x40] sm:$0xff]
    %v239 = vld [vmem:[#allocation11 + $0x48] sm:$0xff]
    %v240 = vld [vmem:[#allocation11 + $0x50] sm:$0xff]
    %v241 = vld [vmem:[#allocation11 + $0x58] sm:$0xff]
    %v242 = vld [vmem:[#allocation11 + $0x60] sm:$0xff]
    %v243 = vld [vmem:[#allocation11 + $0x68] sm:$0xff]
    %v244 = vld [vmem:[#allocation11 + $0x70] sm:$0xff]
    %v245 = vld [vmem:[#allocation11 + $0x78] sm:$0xff]
    %v246 = vld [vmem:[%s6] sm:$0x1]
    %v247 = vld [vmem:[#allocation13] sm:$0xff]
    %v248 = vld [vmem:[#allocation13 + $0x8] sm:$0xff]
    %v249 = vld [vmem:[#allocation13 + $0x10] sm:$0xff]
    %v250 = vld [vmem:[#allocation13 + $0x18] sm:$0xff]
    %v251 = vld [vmem:[#allocation13 + $0x20] sm:$0xff]
    %v252 = vld [vmem:[#allocation13 + $0x28] sm:$0xff]
    %v253 = vld [vmem:[#allocation13 + $0x30] sm:$0xff]
    %v254 = vld [vmem:[#allocation13 + $0x38] sm:$0xff]
    %v255 = vld [vmem:[#allocation13 + $0x40] sm:$0xff]
    %v256 = vld [vmem:[#allocation13 + $0x48] sm:$0xff]
    %v257 = vld [vmem:[#allocation13 + $0x50] sm:$0xff]
    %v258 = vld [vmem:[#allocation13 + $0x58] sm:$0xff]
    %v259 = vld [vmem:[#allocation13 + $0x60] sm:$0xff]
    %v260 = vld [vmem:[#allocation13 + $0x68] sm:$0xff]
    %v261 = vld [vmem:[#allocation13 + $0x70] sm:$0xff]
    %v262 = vld [vmem:[#allocation13 + $0x78] sm:$0xff]
    %v263 = vld [vmem:[%s8] sm:$0x1]
    %v264 = vld [vmem:[#allocation14] sm:$0xff]
    %v265 = vld [vmem:[#allocation14 + $0x8] sm:$0xff]
    %v266 = vld [vmem:[#allocation14 + $0x10] sm:$0xff]
    %v267 = vld [vmem:[#allocation14 + $0x18] sm:$0xff]
    %v268 = vld [vmem:[#allocation14 + $0x20] sm:$0xff]
    %v269 = vld [vmem:[#allocation14 + $0x28] sm:$0xff]
    %v270 = vld [vmem:[#allocation14 + $0x30] sm:$0xff]
    %v271 = vld [vmem:[#allocation14 + $0x38] sm:$0xff]
    %v272 = vld [vmem:[#allocation14 + $0x40] sm:$0xff]
    %v273 = vld [vmem:[#allocation14 + $0x48] sm:$0xff]
    %v274 = vld [vmem:[#allocation14 + $0x50] sm:$0xff]
    %v275 = vld [vmem:[#allocation14 + $0x58] sm:$0xff]
    %v276 = vld [vmem:[#allocation14 + $0x60] sm:$0xff]
    %v277 = vld [vmem:[#allocation14 + $0x68] sm:$0xff]
    %v278 = vld [vmem:[#allocation14 + $0x70] sm:$0xff]
    %v279 = vld [vmem:[#allocation14 + $0x78] sm:$0xff]
    %v280 = vld [vmem:[%s10] sm:$0x1]
    %v282 = vperm.slane %v246, 0
    %284 = vmatpush.msra.mxu0 %v245
    %285 = vmatpush.msra.mxu0 %v244
    %286 = vmatpush.msra.mxu0 %v243
    %287 = vmatpush.msra.mxu0 %v242
    %288 = vmatpush.msra.mxu0 %v241
    %289 = vmatpush.msra.mxu0 %v240
    %290 = vmatpush.msra.mxu0 %v239
    %291 = vmatpush.msra.mxu0 %v238
    %292 = vmatpush.msra.mxu0 %v237
    %293 = vmatpush.msra.mxu0 %v236
    %294 = vmatpush.msra.mxu0 %v235
    %295 = vmatpush.msra.mxu0 %v234
    %296 = vmatpush.msra.mxu0 %v233
    %297 = vmatpush.msra.mxu0 %v232
    %298 = vmatpush.msra.mxu0 %v231
    %299 = vmatpush.msra.mxu0 %v230
    %300 = vmatmul.f32.gmra.mxu0 %v224
    %v301 = vpop.f32.mrf.mxu0
    %v302 = vadd.f32 %v282, %v301
    %303 = vmatmul.f32.gmra.mxu0 %v225
    %v304 = vpop.f32.mrf.mxu0
    %v305 = vadd.f32 %v282, %v304
    %306 = vdwg.mxu0
    %v307 = vmax.f32 %v302, 0.0
    %v308 = vmax.f32 %v305, 0.0
    %v309 = vsub.f32 %v228, 1.0
    %v310 = vsub.f32 %v229, 1.0
    %v311 = vmul.f32 %v309, 1e+30
    %v312 = vmul.f32 %v310, 1e+30
    %314 = vset.pattern.permute.xlu0 0
    %315 = vperm.xlu0 %314, %v226
    %v316 = vpop.permute.xlu0 %315
    %319 = vset.pattern.permute.xlu0 0
    %320 = vperm.xlu0 %319, %v227
    %v321 = vpop.permute.xlu0 %320
    %v323 = vperm.slane %v307, 0
    %v324 = vmul.f32 %v316, %v323
    %v325 = vmul.f32 %v321, %v323
    %327 = vset.pattern.permute.xlu0 0
    %328 = vperm.xlu0 %327, %v311
    %v329 = vpop.permute.xlu0 %328
    %332 = vset.pattern.permute.xlu0 0
    %333 = vperm.xlu0 %332, %v312
    %v334 = vpop.permute.xlu0 %333
    %v336 = vadd.f32 %v324, %v329
    %v337 = vadd.f32 %v325, %v334
    %v338 = vmax.f32 %v336, -1e+30
    %v339 = vmax.f32 %v337, -1e+30
    %340 = vset.pattern.permute.xlu0 1
    %341 = vperm.xlu0 %340, %v226
    %v342 = vpop.permute.xlu0 %341
    %344 = vset.pattern.permute.xlu0 1
    %345 = vperm.xlu0 %344, %v227
    %v346 = vpop.permute.xlu0 %345
    %v348 = vperm.slane %v307, 1
    %v349 = vmul.f32 %v342, %v348
    %v350 = vmul.f32 %v346, %v348
    %351 = vset.pattern.permute.xlu0 1
    %352 = vperm.xlu0 %351, %v311
    %v353 = vpop.permute.xlu0 %352
    %355 = vset.pattern.permute.xlu0 1
    %356 = vperm.xlu0 %355, %v312
    %v357 = vpop.permute.xlu0 %356
    %v359 = vadd.f32 %v349, %v353
    %v360 = vadd.f32 %v350, %v357
    %v361 = vmax.f32 %v338, %v359
    %v362 = vmax.f32 %v339, %v360
    %363 = vset.pattern.permute.xlu0 2
    %364 = vperm.xlu0 %363, %v226
    %v365 = vpop.permute.xlu0 %364
    %367 = vset.pattern.permute.xlu0 2
    %368 = vperm.xlu0 %367, %v227
    %v369 = vpop.permute.xlu0 %368
    %v371 = vperm.slane %v307, 2
    %v372 = vmul.f32 %v365, %v371
    %v373 = vmul.f32 %v369, %v371
    %374 = vset.pattern.permute.xlu0 2
    %375 = vperm.xlu0 %374, %v311
    %v376 = vpop.permute.xlu0 %375
    %378 = vset.pattern.permute.xlu0 2
    %379 = vperm.xlu0 %378, %v312
    %v380 = vpop.permute.xlu0 %379
    %v382 = vadd.f32 %v372, %v376
    %v383 = vadd.f32 %v373, %v380
    %v384 = vmax.f32 %v361, %v382
    %v385 = vmax.f32 %v362, %v383
    %386 = vset.pattern.permute.xlu0 3
    %387 = vperm.xlu0 %386, %v226
    %v388 = vpop.permute.xlu0 %387
    %390 = vset.pattern.permute.xlu0 3
    %391 = vperm.xlu0 %390, %v227
    %v392 = vpop.permute.xlu0 %391
    %v394 = vperm.slane %v307, 3
    %v395 = vmul.f32 %v388, %v394
    %v396 = vmul.f32 %v392, %v394
    %397 = vset.pattern.permute.xlu0 3
    %398 = vperm.xlu0 %397, %v311
    %v399 = vpop.permute.xlu0 %398
    %401 = vset.pattern.permute.xlu0 3
    %402 = vperm.xlu0 %401, %v312
    %v403 = vpop.permute.xlu0 %402
    %v405 = vadd.f32 %v395, %v399
    %v406 = vadd.f32 %v396, %v403
    %v407 = vmax.f32 %v384, %v405
    %v408 = vmax.f32 %v385, %v406
    %409 = vset.pattern.permute.xlu0 4
    %410 = vperm.xlu0 %409, %v226
    %v411 = vpop.permute.xlu0 %410
    %413 = vset.pattern.permute.xlu0 4
    %414 = vperm.xlu0 %413, %v227
    %v415 = vpop.permute.xlu0 %414
    %v417 = vperm.slane %v307, 4
    %v418 = vmul.f32 %v411, %v417
    %v419 = vmul.f32 %v415, %v417
    %420 = vset.pattern.permute.xlu0 4
    %421 = vperm.xlu0 %420, %v311
    %v422 = vpop.permute.xlu0 %421
    %424 = vset.pattern.permute.xlu0 4
    %425 = vperm.xlu0 %424, %v312
    %v426 = vpop.permute.xlu0 %425
    %v428 = vadd.f32 %v418, %v422
    %v429 = vadd.f32 %v419, %v426
    %v430 = vmax.f32 %v407, %v428
    %v431 = vmax.f32 %v408, %v429
    %432 = vset.pattern.permute.xlu0 5
    %433 = vperm.xlu0 %432, %v226
    %v434 = vpop.permute.xlu0 %433
    %436 = vset.pattern.permute.xlu0 5
    %437 = vperm.xlu0 %436, %v227
    %v438 = vpop.permute.xlu0 %437
    %v440 = vperm.slane %v307, 5
    %v441 = vmul.f32 %v434, %v440
    %v442 = vmul.f32 %v438, %v440
    %443 = vset.pattern.permute.xlu0 5
    %444 = vperm.xlu0 %443, %v311
    %v445 = vpop.permute.xlu0 %444
    %447 = vset.pattern.permute.xlu0 5
    %448 = vperm.xlu0 %447, %v312
    %v449 = vpop.permute.xlu0 %448
    %v451 = vadd.f32 %v441, %v445
    %v452 = vadd.f32 %v442, %v449
    %v453 = vmax.f32 %v430, %v451
    %v454 = vmax.f32 %v431, %v452
    %455 = vset.pattern.permute.xlu0 6
    %456 = vperm.xlu0 %455, %v226
    %v457 = vpop.permute.xlu0 %456
    %459 = vset.pattern.permute.xlu0 6
    %460 = vperm.xlu0 %459, %v227
    %v461 = vpop.permute.xlu0 %460
    %v463 = vperm.slane %v307, 6
    %v464 = vmul.f32 %v457, %v463
    %v465 = vmul.f32 %v461, %v463
    %466 = vset.pattern.permute.xlu0 6
    %467 = vperm.xlu0 %466, %v311
    %v468 = vpop.permute.xlu0 %467
    %470 = vset.pattern.permute.xlu0 6
    %471 = vperm.xlu0 %470, %v312
    %v472 = vpop.permute.xlu0 %471
    %v474 = vadd.f32 %v464, %v468
    %v475 = vadd.f32 %v465, %v472
    %v476 = vmax.f32 %v453, %v474
    %v477 = vmax.f32 %v454, %v475
    %478 = vset.pattern.permute.xlu0 7
    %479 = vperm.xlu0 %478, %v226
    %v480 = vpop.permute.xlu0 %479
    %482 = vset.pattern.permute.xlu0 7
    %483 = vperm.xlu0 %482, %v227
    %v484 = vpop.permute.xlu0 %483
    %v486 = vperm.slane %v307, 7
    %v487 = vmul.f32 %v480, %v486
    %v488 = vmul.f32 %v484, %v486
    %489 = vset.pattern.permute.xlu0 7
    %490 = vperm.xlu0 %489, %v311
    %v491 = vpop.permute.xlu0 %490
    %493 = vset.pattern.permute.xlu0 7
    %494 = vperm.xlu0 %493, %v312
    %v495 = vpop.permute.xlu0 %494
    %v497 = vadd.f32 %v487, %v491
    %v498 = vadd.f32 %v488, %v495
    %v499 = vmax.f32 %v476, %v497
    %v500 = vmax.f32 %v477, %v498
    %501 = vset.pattern.permute.xlu0 8
    %502 = vperm.xlu0 %501, %v226
    %v503 = vpop.permute.xlu0 %502
    %505 = vset.pattern.permute.xlu0 8
    %506 = vperm.xlu0 %505, %v227
    %v507 = vpop.permute.xlu0 %506
    %v509 = vperm.slane %v308, 0
    %v510 = vmul.f32 %v503, %v509
    %v511 = vmul.f32 %v507, %v509
    %512 = vset.pattern.permute.xlu0 8
    %513 = vperm.xlu0 %512, %v311
    %v514 = vpop.permute.xlu0 %513
    %516 = vset.pattern.permute.xlu0 8
    %517 = vperm.xlu0 %516, %v312
    %v518 = vpop.permute.xlu0 %517
    %v520 = vadd.f32 %v510, %v514
    %v521 = vadd.f32 %v511, %v518
    %v522 = vmax.f32 %v499, %v520
    %v523 = vmax.f32 %v500, %v521
    %524 = vset.pattern.permute.xlu0 9
    %525 = vperm.xlu0 %524, %v226
    %v526 = vpop.permute.xlu0 %525
    %528 = vset.pattern.permute.xlu0 9
    %529 = vperm.xlu0 %528, %v227
    %v530 = vpop.permute.xlu0 %529
    %v532 = vperm.slane %v308, 1
    %v533 = vmul.f32 %v526, %v532
    %v534 = vmul.f32 %v530, %v532
    %535 = vset.pattern.permute.xlu0 9
    %536 = vperm.xlu0 %535, %v311
    %v537 = vpop.permute.xlu0 %536
    %539 = vset.pattern.permute.xlu0 9
    %540 = vperm.xlu0 %539, %v312
    %v541 = vpop.permute.xlu0 %540
    %v543 = vadd.f32 %v533, %v537
    %v544 = vadd.f32 %v534, %v541
    %v545 = vmax.f32 %v522, %v543
    %v546 = vmax.f32 %v523, %v544
    %547 = vset.pattern.permute.xlu0 10
    %548 = vperm.xlu0 %547, %v226
    %v549 = vpop.permute.xlu0 %548
    %551 = vset.pattern.permute.xlu0 10
    %552 = vperm.xlu0 %551, %v227
    %v553 = vpop.permute.xlu0 %552
    %v555 = vperm.slane %v308, 2
    %v556 = vmul.f32 %v549, %v555
    %v557 = vmul.f32 %v553, %v555
    %558 = vset.pattern.permute.xlu0 10
    %559 = vperm.xlu0 %558, %v311
    %v560 = vpop.permute.xlu0 %559
    %562 = vset.pattern.permute.xlu0 10
    %563 = vperm.xlu0 %562, %v312
    %v564 = vpop.permute.xlu0 %563
    %v566 = vadd.f32 %v556, %v560
    %v567 = vadd.f32 %v557, %v564
    %v568 = vmax.f32 %v545, %v566
    %v569 = vmax.f32 %v546, %v567
    %570 = vset.pattern.permute.xlu0 11
    %571 = vperm.xlu0 %570, %v226
    %v572 = vpop.permute.xlu0 %571
    %574 = vset.pattern.permute.xlu0 11
    %575 = vperm.xlu0 %574, %v227
    %v576 = vpop.permute.xlu0 %575
    %v578 = vperm.slane %v308, 3
    %v579 = vmul.f32 %v572, %v578
    %v580 = vmul.f32 %v576, %v578
    %581 = vset.pattern.permute.xlu0 11
    %582 = vperm.xlu0 %581, %v311
    %v583 = vpop.permute.xlu0 %582
    %585 = vset.pattern.permute.xlu0 11
    %586 = vperm.xlu0 %585, %v312
    %v587 = vpop.permute.xlu0 %586
    %v589 = vadd.f32 %v579, %v583
    %v590 = vadd.f32 %v580, %v587
    %v591 = vmax.f32 %v568, %v589
    %v592 = vmax.f32 %v569, %v590
    %593 = vset.pattern.permute.xlu0 12
    %594 = vperm.xlu0 %593, %v226
    %v595 = vpop.permute.xlu0 %594
    %597 = vset.pattern.permute.xlu0 12
    %598 = vperm.xlu0 %597, %v227
    %v599 = vpop.permute.xlu0 %598
    %v601 = vperm.slane %v308, 4
    %v602 = vmul.f32 %v595, %v601
    %v603 = vmul.f32 %v599, %v601
    %604 = vset.pattern.permute.xlu0 12
    %605 = vperm.xlu0 %604, %v311
    %v606 = vpop.permute.xlu0 %605
    %608 = vset.pattern.permute.xlu0 12
    %609 = vperm.xlu0 %608, %v312
    %v610 = vpop.permute.xlu0 %609
    %v612 = vadd.f32 %v602, %v606
    %v613 = vadd.f32 %v603, %v610
    %v614 = vmax.f32 %v591, %v612
    %v615 = vmax.f32 %v592, %v613
    %616 = vset.pattern.permute.xlu0 13
    %617 = vperm.xlu0 %616, %v226
    %v618 = vpop.permute.xlu0 %617
    %620 = vset.pattern.permute.xlu0 13
    %621 = vperm.xlu0 %620, %v227
    %v622 = vpop.permute.xlu0 %621
    %v624 = vperm.slane %v308, 5
    %v625 = vmul.f32 %v618, %v624
    %v626 = vmul.f32 %v622, %v624
    %627 = vset.pattern.permute.xlu0 13
    %628 = vperm.xlu0 %627, %v311
    %v629 = vpop.permute.xlu0 %628
    %631 = vset.pattern.permute.xlu0 13
    %632 = vperm.xlu0 %631, %v312
    %v633 = vpop.permute.xlu0 %632
    %v635 = vadd.f32 %v625, %v629
    %v636 = vadd.f32 %v626, %v633
    %v637 = vmax.f32 %v614, %v635
    %v638 = vmax.f32 %v615, %v636
    %639 = vset.pattern.permute.xlu0 14
    %640 = vperm.xlu0 %639, %v226
    %v641 = vpop.permute.xlu0 %640
    %643 = vset.pattern.permute.xlu0 14
    %644 = vperm.xlu0 %643, %v227
    %v645 = vpop.permute.xlu0 %644
    %v647 = vperm.slane %v308, 6
    %v648 = vmul.f32 %v641, %v647
    %v649 = vmul.f32 %v645, %v647
    %650 = vset.pattern.permute.xlu0 14
    %651 = vperm.xlu0 %650, %v311
    %v652 = vpop.permute.xlu0 %651
    %654 = vset.pattern.permute.xlu0 14
    %655 = vperm.xlu0 %654, %v312
    %v656 = vpop.permute.xlu0 %655
    %v658 = vadd.f32 %v648, %v652
    %v659 = vadd.f32 %v649, %v656
    %v660 = vmax.f32 %v637, %v658
    %v661 = vmax.f32 %v638, %v659
    %662 = vset.pattern.permute.xlu0 15
    %663 = vperm.xlu0 %662, %v226
    %v664 = vpop.permute.xlu0 %663
    %666 = vset.pattern.permute.xlu0 15
    %667 = vperm.xlu0 %666, %v227
    %v668 = vpop.permute.xlu0 %667
    %v670 = vperm.slane %v308, 7
    %v671 = vmul.f32 %v664, %v670
    %v672 = vmul.f32 %v668, %v670
    %673 = vset.pattern.permute.xlu0 15
    %674 = vperm.xlu0 %673, %v311
    %v675 = vpop.permute.xlu0 %674
    %677 = vset.pattern.permute.xlu0 15
    %678 = vperm.xlu0 %677, %v312
    %v679 = vpop.permute.xlu0 %678
    %v681 = vadd.f32 %v671, %v675
    %v682 = vadd.f32 %v672, %v679
    %v683 = vmax.f32 %v660, %v681
    %v684 = vmax.f32 %v661, %v682
    %vm685 = vcmask 130048
    %v686 = vsel %vm685, %v228, 0.0
    %687 = vadd.xlane.f32.xlu0 %v686
    %v688 = vpop.xlane.xlu0 %687
    %v689 = vsel %vm685, %v229, 0.0
    %690 = vadd.xlane.f32.xlu0 %v689
    %v691 = vpop.xlane.xlu0 %690
    %vm692 = vcmp.gt.f32.partialorder %v688, 0.0
    %vm693 = vcmp.gt.f32.partialorder %v691, 0.0
    %v694 = vsel %vm692, 1, 0
    %v695 = vsel %vm693, 1, 0
    %vm696 = vcmp.eq.s32.totalorder %v694, 1
    %vm697 = vcmp.eq.s32.totalorder %v695, 1
    %v698 = vsel %vm696, %v683, 0.0
    %v699 = vsel %vm697, %v684, 0.0
    %v701 = vperm.slane %v263, 0
    %703 = vmatpush.msra.mxu0 %v262
    %704 = vmatpush.msra.mxu0 %v261
    %705 = vmatpush.msra.mxu0 %v260
    %706 = vmatpush.msra.mxu0 %v259
    %707 = vmatpush.msra.mxu0 %v258
    %708 = vmatpush.msra.mxu0 %v257
    %709 = vmatpush.msra.mxu0 %v256
    %710 = vmatpush.msra.mxu0 %v255
    %711 = vmatpush.msra.mxu0 %v254
    %712 = vmatpush.msra.mxu0 %v253
    %713 = vmatpush.msra.mxu0 %v252
    %714 = vmatpush.msra.mxu0 %v251
    %715 = vmatpush.msra.mxu0 %v250
    %716 = vmatpush.msra.mxu0 %v249
    %717 = vmatpush.msra.mxu0 %v248
    %718 = vmatpush.msra.mxu0 %v247
    %719 = vmatmul.f32.gmra.mxu0 %v224
    %v720 = vpop.f32.mrf.mxu0
    %v721 = vadd.f32 %v701, %v720
    %722 = vmatmul.f32.gmra.mxu0 %v225
    %v723 = vpop.f32.mrf.mxu0
    %v724 = vadd.f32 %v701, %v723
    %725 = vdwg.mxu0
    %726 = vmatpush.msra.mxu0 %v279
    %727 = vmatpush.msra.mxu0 %v278
    %728 = vmatpush.msra.mxu0 %v277
    %729 = vmatpush.msra.mxu0 %v276
    %730 = vmatpush.msra.mxu0 %v275
    %731 = vmatpush.msra.mxu0 %v274
    %732 = vmatpush.msra.mxu0 %v273
    %733 = vmatpush.msra.mxu0 %v272
    %734 = vmatpush.msra.mxu0 %v271
    %735 = vmatpush.msra.mxu0 %v270
    %736 = vmatpush.msra.mxu0 %v269
    %737 = vmatpush.msra.mxu0 %v268
    %738 = vmatpush.msra.mxu0 %v267
    %739 = vmatpush.msra.mxu0 %v266
    %740 = vmatpush.msra.mxu0 %v265
    %741 = vmatpush.msra.mxu0 %v264
    %742 = vmatmul.f32.gmra.mxu0 %v698
    %v743 = vpop.f32.mrf.mxu0
    %v744 = vadd.f32 0.0, %v743
    %745 = vmatmul.f32.gmra.mxu0 %v699
    %v746 = vpop.f32.mrf.mxu0
    %v747 = vadd.f32 0.0, %v746
    %748 = vdwg.mxu0
    %v749 = vadd.f32 %v721, %v744
    %v750 = vadd.f32 %v724, %v747
    %v752 = vperm.slane %v280, 0
    %v754 = vadd.f32 %v749, %v752
    %v755 = vadd.f32 %v750, %v752
    %v756 = vmax.f32 %v754, 0.0
    %v757 = vmax.f32 %v755, 0.0
    %v758 = vld [vmem:[#allocation8] sm:$0xff]
    %v759 = vld [vmem:[#allocation10] sm:$0xff]
    %v760 = vld [vmem:[#allocation16] sm:$0xff]
    %v761 = vld [vmem:[#allocation16 + $0x8] sm:$0xff]
    %v762 = vld [vmem:[#allocation16 + $0x10] sm:$0xff]
    %v763 = vld [vmem:[#allocation16 + $0x18] sm:$0xff]
    %v764 = vld [vmem:[#allocation16 + $0x20] sm:$0xff]
    %v765 = vld [vmem:[#allocation16 + $0x28] sm:$0xff]
    %v766 = vld [vmem:[#allocation16 + $0x30] sm:$0xff]
    %v767 = vld [vmem:[#allocation16 + $0x38] sm:$0xff]
    %v768 = vld [vmem:[#allocation16 + $0x40] sm:$0xff]
    %v769 = vld [vmem:[#allocation16 + $0x48] sm:$0xff]
    %v770 = vld [vmem:[#allocation16 + $0x50] sm:$0xff]
    %v771 = vld [vmem:[#allocation16 + $0x58] sm:$0xff]
    %v772 = vld [vmem:[#allocation16 + $0x60] sm:$0xff]
    %v773 = vld [vmem:[#allocation16 + $0x68] sm:$0xff]
    %v774 = vld [vmem:[#allocation16 + $0x70] sm:$0xff]
    %v775 = vld [vmem:[#allocation16 + $0x78] sm:$0xff]
    %v776 = vld [vmem:[%s12] sm:$0x1]
    %v777 = vld [vmem:[#allocation17] sm:$0xff]
    %v778 = vld [vmem:[#allocation17 + $0x8] sm:$0xff]
    %v779 = vld [vmem:[#allocation17 + $0x10] sm:$0xff]
    %v780 = vld [vmem:[#allocation17 + $0x18] sm:$0xff]
    %v781 = vld [vmem:[#allocation17 + $0x20] sm:$0xff]
    %v782 = vld [vmem:[#allocation17 + $0x28] sm:$0xff]
    %v783 = vld [vmem:[#allocation17 + $0x30] sm:$0xff]
    %v784 = vld [vmem:[#allocation17 + $0x38] sm:$0xff]
    %v785 = vld [vmem:[#allocation17 + $0x40] sm:$0xff]
    %v786 = vld [vmem:[#allocation17 + $0x48] sm:$0xff]
    %v787 = vld [vmem:[#allocation17 + $0x50] sm:$0xff]
    %v788 = vld [vmem:[#allocation17 + $0x58] sm:$0xff]
    %v789 = vld [vmem:[#allocation17 + $0x60] sm:$0xff]
    %v790 = vld [vmem:[#allocation17 + $0x68] sm:$0xff]
    %v791 = vld [vmem:[#allocation17 + $0x70] sm:$0xff]
    %v792 = vld [vmem:[#allocation17 + $0x78] sm:$0xff]
    %v793 = vld [vmem:[%s14] sm:$0x1]
    %v794 = vld [vmem:[#allocation19] sm:$0xff]
    %v795 = vld [vmem:[#allocation19 + $0x8] sm:$0xff]
    %v796 = vld [vmem:[#allocation19 + $0x10] sm:$0xff]
    %v797 = vld [vmem:[#allocation19 + $0x18] sm:$0xff]
    %v798 = vld [vmem:[#allocation19 + $0x20] sm:$0xff]
    %v799 = vld [vmem:[#allocation19 + $0x28] sm:$0xff]
    %v800 = vld [vmem:[#allocation19 + $0x30] sm:$0xff]
    %v801 = vld [vmem:[#allocation19 + $0x38] sm:$0xff]
    %v802 = vld [vmem:[#allocation19 + $0x40] sm:$0xff]
    %v803 = vld [vmem:[#allocation19 + $0x48] sm:$0xff]
    %v804 = vld [vmem:[#allocation19 + $0x50] sm:$0xff]
    %v805 = vld [vmem:[#allocation19 + $0x58] sm:$0xff]
    %v806 = vld [vmem:[#allocation19 + $0x60] sm:$0xff]
    %v807 = vld [vmem:[#allocation19 + $0x68] sm:$0xff]
    %v808 = vld [vmem:[#allocation19 + $0x70] sm:$0xff]
    %v809 = vld [vmem:[#allocation19 + $0x78] sm:$0xff]
    %v810 = vld [vmem:[%s16] sm:$0x1]
    %v812 = vperm.slane %v776, 0
    %814 = vmatpush.msra.mxu0 %v775
    %815 = vmatpush.msra.mxu0 %v774
    %816 = vmatpush.msra.mxu0 %v773
    %817 = vmatpush.msra.mxu0 %v772
    %818 = vmatpush.msra.mxu0 %v771
    %819 = vmatpush.msra.mxu0 %v770
    %820 = vmatpush.msra.mxu0 %v769
    %821 = vmatpush.msra.mxu0 %v768
    %822 = vmatpush.msra.mxu0 %v767
    %823 = vmatpush.msra.mxu0 %v766
    %824 = vmatpush.msra.mxu0 %v765
    %825 = vmatpush.msra.mxu0 %v764
    %826 = vmatpush.msra.mxu0 %v763
    %827 = vmatpush.msra.mxu0 %v762
    %828 = vmatpush.msra.mxu0 %v761
    %829 = vmatpush.msra.mxu0 %v760
    %830 = vmatmul.f32.gmra.mxu0 %v756
    %v831 = vpop.f32.mrf.mxu0
    %v832 = vadd.f32 %v812, %v831
    %833 = vmatmul.f32.gmra.mxu0 %v757
    %v834 = vpop.f32.mrf.mxu0
    %v835 = vadd.f32 %v812, %v834
    %836 = vdwg.mxu0
    %v837 = vmax.f32 %v832, 0.0
    %v838 = vmax.f32 %v835, 0.0
    %v839 = vsub.f32 %v759, 1.0
    %v840 = vmul.f32 %v839, 1e+30
    %842 = vset.pattern.permute.xlu0 0
    %843 = vperm.xlu0 %842, %v758
    %v844 = vpop.permute.xlu0 %843
    %v846 = vperm.slane %v837, 0
    %v847 = vmul.f32 %v844, %v846
    %849 = vset.pattern.permute.xlu0 0
    %850 = vperm.xlu0 %849, %v840
    %v851 = vpop.permute.xlu0 %850
    %v853 = vadd.f32 %v847, %v851
    %v854 = vmax.f32 %v853, -1e+30
    %855 = vset.pattern.permute.xlu0 1
    %856 = vperm.xlu0 %855, %v758
    %v857 = vpop.permute.xlu0 %856
    %v859 = vperm.slane %v837, 1
    %v860 = vmul.f32 %v857, %v859
    %861 = vset.pattern.permute.xlu0 1
    %862 = vperm.xlu0 %861, %v840
    %v863 = vpop.permute.xlu0 %862
    %v865 = vadd.f32 %v860, %v863
    %v866 = vmax.f32 %v854, %v865
    %867 = vset.pattern.permute.xlu0 2
    %868 = vperm.xlu0 %867, %v758
    %v869 = vpop.permute.xlu0 %868
    %v871 = vperm.slane %v837, 2
    %v872 = vmul.f32 %v869, %v871
    %873 = vset.pattern.permute.xlu0 2
    %874 = vperm.xlu0 %873, %v840
    %v875 = vpop.permute.xlu0 %874
    %v877 = vadd.f32 %v872, %v875
    %v878 = vmax.f32 %v866, %v877
    %879 = vset.pattern.permute.xlu0 3
    %880 = vperm.xlu0 %879, %v758
    %v881 = vpop.permute.xlu0 %880
    %v883 = vperm.slane %v837, 3
    %v884 = vmul.f32 %v881, %v883
    %885 = vset.pattern.permute.xlu0 3
    %886 = vperm.xlu0 %885, %v840
    %v887 = vpop.permute.xlu0 %886
    %v889 = vadd.f32 %v884, %v887
    %v890 = vmax.f32 %v878, %v889
    %891 = vset.pattern.permute.xlu0 4
    %892 = vperm.xlu0 %891, %v758
    %v893 = vpop.permute.xlu0 %892
    %v895 = vperm.slane %v837, 4
    %v896 = vmul.f32 %v893, %v895
    %897 = vset.pattern.permute.xlu0 4
    %898 = vperm.xlu0 %897, %v840
    %v899 = vpop.permute.xlu0 %898
    %v901 = vadd.f32 %v896, %v899
    %v902 = vmax.f32 %v890, %v901
    %903 = vset.pattern.permute.xlu0 5
    %904 = vperm.xlu0 %903, %v758
    %v905 = vpop.permute.xlu0 %904
    %v907 = vperm.slane %v837, 5
    %v908 = vmul.f32 %v905, %v907
    %909 = vset.pattern.permute.xlu0 5
    %910 = vperm.xlu0 %909, %v840
    %v911 = vpop.permute.xlu0 %910
    %v913 = vadd.f32 %v908, %v911
    %v914 = vmax.f32 %v902, %v913
    %915 = vset.pattern.permute.xlu0 6
    %916 = vperm.xlu0 %915, %v758
    %v917 = vpop.permute.xlu0 %916
    %v919 = vperm.slane %v837, 6
    %v920 = vmul.f32 %v917, %v919
    %921 = vset.pattern.permute.xlu0 6
    %922 = vperm.xlu0 %921, %v840
    %v923 = vpop.permute.xlu0 %922
    %v925 = vadd.f32 %v920, %v923
    %v926 = vmax.f32 %v914, %v925
    %927 = vset.pattern.permute.xlu0 7
    %928 = vperm.xlu0 %927, %v758
    %v929 = vpop.permute.xlu0 %928
    %v931 = vperm.slane %v837, 7
    %v932 = vmul.f32 %v929, %v931
    %933 = vset.pattern.permute.xlu0 7
    %934 = vperm.xlu0 %933, %v840
    %v935 = vpop.permute.xlu0 %934
    %v937 = vadd.f32 %v932, %v935
    %v938 = vmax.f32 %v926, %v937
    %939 = vset.pattern.permute.xlu0 8
    %940 = vperm.xlu0 %939, %v758
    %v941 = vpop.permute.xlu0 %940
    %v943 = vperm.slane %v838, 0
    %v944 = vmul.f32 %v941, %v943
    %945 = vset.pattern.permute.xlu0 8
    %946 = vperm.xlu0 %945, %v840
    %v947 = vpop.permute.xlu0 %946
    %v949 = vadd.f32 %v944, %v947
    %v950 = vmax.f32 %v938, %v949
    %951 = vset.pattern.permute.xlu0 9
    %952 = vperm.xlu0 %951, %v758
    %v953 = vpop.permute.xlu0 %952
    %v955 = vperm.slane %v838, 1
    %v956 = vmul.f32 %v953, %v955
    %957 = vset.pattern.permute.xlu0 9
    %958 = vperm.xlu0 %957, %v840
    %v959 = vpop.permute.xlu0 %958
    %v961 = vadd.f32 %v956, %v959
    %v962 = vmax.f32 %v950, %v961
    %963 = vset.pattern.permute.xlu0 10
    %964 = vperm.xlu0 %963, %v758
    %v965 = vpop.permute.xlu0 %964
    %v967 = vperm.slane %v838, 2
    %v968 = vmul.f32 %v965, %v967
    %969 = vset.pattern.permute.xlu0 10
    %970 = vperm.xlu0 %969, %v840
    %v971 = vpop.permute.xlu0 %970
    %v973 = vadd.f32 %v968, %v971
    %v974 = vmax.f32 %v962, %v973
    %975 = vset.pattern.permute.xlu0 11
    %976 = vperm.xlu0 %975, %v758
    %v977 = vpop.permute.xlu0 %976
    %v979 = vperm.slane %v838, 3
    %v980 = vmul.f32 %v977, %v979
    %981 = vset.pattern.permute.xlu0 11
    %982 = vperm.xlu0 %981, %v840
    %v983 = vpop.permute.xlu0 %982
    %v985 = vadd.f32 %v980, %v983
    %v986 = vmax.f32 %v974, %v985
    %v987 = vsel %vm685, %v759, 0.0
    %988 = vadd.xlane.f32.xlu0 %v987
    %v989 = vpop.xlane.xlu0 %988
    %vm990 = vcmp.gt.f32.partialorder %v989, 0.0
    %v991 = vsel %vm990, 1, 0
    %vm992 = vcmp.eq.s32.totalorder %v991, 1
    %v993 = vsel %vm992, %v986, 0.0
    %v995 = vperm.slane %v793, 0
    %997 = vmatpush.msra.mxu0 %v792
    %998 = vmatpush.msra.mxu0 %v791
    %999 = vmatpush.msra.mxu0 %v790
    %1000 = vmatpush.msra.mxu0 %v789
    %1001 = vmatpush.msra.mxu0 %v788
    %1002 = vmatpush.msra.mxu0 %v787
    %1003 = vmatpush.msra.mxu0 %v786
    %1004 = vmatpush.msra.mxu0 %v785
    %1005 = vmatpush.msra.mxu0 %v784
    %1006 = vmatpush.msra.mxu0 %v783
    %1007 = vmatpush.msra.mxu0 %v782
    %1008 = vmatpush.msra.mxu0 %v781
    %1009 = vmatpush.msra.mxu0 %v780
    %1010 = vmatpush.msra.mxu0 %v779
    %1011 = vmatpush.msra.mxu0 %v778
    %1012 = vmatpush.msra.mxu0 %v777
    %1013 = vmatmul.f32.gmra.mxu0 %v756
    %v1014 = vpop.f32.mrf.mxu0
    %v1015 = vadd.f32 %v995, %v1014
    %1016 = vdwg.mxu0
    %1017 = vmatpush.msra.mxu0 %v809
    %1018 = vmatpush.msra.mxu0 %v808
    %1019 = vmatpush.msra.mxu0 %v807
    %1020 = vmatpush.msra.mxu0 %v806
    %1021 = vmatpush.msra.mxu0 %v805
    %1022 = vmatpush.msra.mxu0 %v804
    %1023 = vmatpush.msra.mxu0 %v803
    %1024 = vmatpush.msra.mxu0 %v802
    %1025 = vmatpush.msra.mxu0 %v801
    %1026 = vmatpush.msra.mxu0 %v800
    %1027 = vmatpush.msra.mxu0 %v799
    %1028 = vmatpush.msra.mxu0 %v798
    %1029 = vmatpush.msra.mxu0 %v797
    %1030 = vmatpush.msra.mxu0 %v796
    %1031 = vmatpush.msra.mxu0 %v795
    %1032 = vmatpush.msra.mxu0 %v794
    %1033 = vmatmul.f32.gmra.mxu0 %v993
    %v1034 = vpop.f32.mrf.mxu0
    %v1035 = vadd.f32 0.0, %v1034
    %1036 = vdwg.mxu0
    %v1037 = vadd.f32 %v1015, %v1035
    %v1039 = vperm.slane %v810, 0
    %v1041 = vadd.f32 %v1037, %v1039
    %1042 = vst [vmem:[#allocation20] sm:$0xff] %v1041
    // Predicated region
    $region114: #{tpu_custom_call.1} parent=1 // pred_check
      _
    $region115: #{tpu_custom_call.1} parent=1 // pred_check_branch
      %1044 = sbr.rel (0) target = $region117
    $region116: #{tpu_custom_call.1} parent=1 // pred_region
      %1046 = vsyncadd [#allocation4], 0
      %s1048 = sshll.u32 [#allocation20], 4
      %s1049 = int_to_ptr.vmem [resolvable:$true] %s1048
      %s1050 = sshll.u32 %s17, 4
      %s1051 = int_to_ptr.hbm [resolvable:$true] %s1050
      %1053 = dma.vmem_to_hbm [thread:$0]  %s1049, 128, %s1051, [#allocation4]
    $region117: #{tpu_custom_call.1} parent=1 // pred_fallthru
      _
    // Predicated region
    $region118: #{tpu_custom_call.1} parent=1 // pred_check
      _
    $region119: #{tpu_custom_call.1} parent=1 // pred_check_branch
      %1055 = sbr.rel (0) target = $region121
    $region120: #{tpu_custom_call.1} parent=1 // pred_region
      %1057 = dma.done [#allocation4], 128
    $region121: #{tpu_custom_call.1} parent=1 // pred_fallthru
      _
    %1058 = vsyncpa [#allocation3], 1
    %1059 = vsyncpa [#allocation6], 1
    %1060 = vsyncpa [#allocation9], 1
    %1061 = vsyncpa [#allocation12], 1
    %1062 = vsyncpa [#allocation15], 1
    %1063 = vsyncpa [#allocation18], 1
    %1064 = vsyncpa [#allocation4], 1

</llo_original>
